<compile_context>
chip_gen: v7x
topology: tpu7x:2x2x1
jax: 0.10.0
libtpu: 0.0.40
codegen_flags: <defaults>
</compile_context>

<pallas_src>
import jax
import jax.numpy as jnp
import numpy as np
from jax.experimental import pallas as pl
from jax.experimental.pallas import tpu as pltpu

MEM_COUNT = 3


def _emm_kernel(c_ref,                   # (TB, L, D) f32
                q_ref,                   # (TB, 1, D) f32
                len_ref,                 # (TB, 1)    int32
                attw_ref,                # (D, D)     bf16
                w1_ref,                  # (6D, H)    bf16  rows [c, c*q, |c-q|, q, c*m, |c-m|]
                wmgh_ref,                # (D, H+3D)  bf16  [W1 m-rows | w_hh.T]
                wgi_ref,                 # (D, 3D)    bf16  w_ih.T
                misc_ref,                # (8, H)     f32   [dot_q row, dot_m row, b1, w2 row]
                gbias_ref,               # (8, 3D)    f32   [b_ih, b_hh]
                m_out_ref,               # (TB, D)    f32
                att_out_ref):            # (MEM_COUNT, TB, L) f32 (lane-dense on L)
    TB, L, D = c_ref.shape
    H = w1_ref.shape[1]
    f32, bf16 = jnp.float32, jnp.bfloat16

    c = c_ref[...]                       # (TB, L, D)
    q = q_ref[...]                       # (TB, 1, D)
    lens = len_ref[...]                  # (TB, 1) int32

    # ---- weight slabs (already bf16 -- no per-step casts) ----
    attw = attw_ref[...]
    w_cq = w1_ref[0:3 * D, :]            # rows for [c, c*q, |c-q|]
    w_q = w1_ref[3 * D:4 * D, :]         # rows for [q]   (hoisted, contract with q directly)
    w_cm = w1_ref[4 * D:6 * D, :]        # rows for [c*m, |c-m|]
    w_mgh = wmgh_ref[...]                # (D, H+3D): [W1 m-rows | w_hh.T]
    w_gi = wgi_ref[...]                  # (D, 3D)

    misc = misc_ref[...]                 # f32 small blocks
    w1dq, w1dm = misc[0:1, :], misc[1:2, :]
    b1, w2_row = misc[2:3, :], misc[3:4, :]
    gb = gbias_ref[...]
    b_i, b_h = gb[0:1, :], gb[1:2, :]    # (1, 3D) each
    # lin2 bias omitted: softmax is shift-invariant, so it cannot affect outputs.

    # ---- hop-invariant work ----
    c_bf = c.reshape(TB * L, D).astype(bf16)
    cw = jnp.dot(c_bf, attw, preferred_element_type=f32).reshape(TB, L, D)
    dot_q = jnp.sum(cw * q, axis=-1, keepdims=True)                 # (TB, L, 1)

    q2 = q[:, 0, :]                                                 # (TB, D)
    x_cq = jnp.concatenate([c, c * q, jnp.abs(c - q)], axis=-1)     # (TB, L, 3D)
    base = jnp.dot(x_cq.reshape(TB * L, 3 * D).astype(bf16), w_cq,
                   preferred_element_type=f32).reshape(TB, L, H)
    qh = jnp.dot(q2.astype(bf16), w_q, preferred_element_type=f32)  # (TB, H)
    base = base + qh[:, None, :] + dot_q * w1dq + b1                # (TB, L, H)

    # ---- validity mask: one vector compare, no scalar loads ----
    col = jax.lax.broadcasted_iota(jnp.int32, (TB, L), 1)
    valid = col < lens                                              # (TB, L)

    # ---- memory hops ----
    m = q                                                           # (TB, 1, D)
    atts = []
    for _ in range(MEM_COUNT):
        m2 = m[:, 0, :]                                             # (TB, D)
        # One lane-dense push: [m-row of lin1 | GRU hidden-side] = (TB, D)@(D, H+3D)
        mh = jnp.dot(m2.astype(bf16), w_mgh, preferred_element_type=f32)
        hm = mh[:, :H]                                              # (TB, H)
        gh = mh[:, H:] + b_h                                        # (TB, 3D)

        dot_m = jnp.sum(cw * m, axis=-1, keepdims=True)             # (TB, L, 1)
        x_cm = jnp.concatenate([c * m, jnp.abs(c - m)], axis=-1)    # (TB, L, 2D)
        h = base + hm[:, None, :] + dot_m * w1dm + jnp.dot(
            x_cm.reshape(TB * L, 2 * D).astype(bf16), w_cm,
            preferred_element_type=f32).reshape(TB, L, H)
        h = jnp.tanh(h)

        # score: VPU lane-reduce instead of an (L,H)@(H,1) MXU push
        s = jnp.sum(h * w2_row, axis=-1)                            # (TB, L)

        # length-masked softmax over the lane axis (EUP approx reciprocal)
        s = jnp.where(valid, s, -jnp.inf)
        smax = jnp.max(s, axis=-1, keepdims=True)
        ex = jnp.where(valid, jnp.exp(s - smax), 0.0)
        att = ex * pl.reciprocal(jnp.sum(ex, axis=-1, keepdims=True), approx=True)
        atts.append(att)

        # e = sum_l att * c   (L is tiny: sublane reduce)
        e = jnp.sum(c * att[:, :, None], axis=1)                    # (TB, D)

        # GRU input-side matmul; gates from the fused gh above
        gi = jnp.dot(e.astype(bf16), w_gi, preferred_element_type=f32) + b_i
        r = jax.nn.sigmoid(gi[:, :D] + gh[:, :D])
        z = jax.nn.sigmoid(gi[:, D:2 * D] + gh[:, D:2 * D])
        n = jnp.tanh(gi[:, 2 * D:] + r * gh[:, 2 * D:])
        m2 = (1.0 - z) * n + z * m2
        m = m2[:, None, :]

    m_out_ref[...] = m[:, 0, :]
    att_out_ref[...] = jnp.stack(atts, axis=0)                      # one store, lane-dense


def _pick_tb(B, L):
    """Batch-tile selection.

    At small sizes the kernel is latency-bound: each extra grid step costs
    ~0.35us of prologue and re-runs the weight unpack, and v5e/v6e have a single
    TensorCore anyway, so the whole batch goes in one grid step.  Only for large
    workloads do we tile (TB*L ~ 512 rows); TB must divide B and be a multiple
    of 8 (layout of the (TB, 1) length block) unless it equals B.
    """
    if B * L <= 2048:
        return B
    target = max(1, 512 // max(L, 1))
    for tb in range(min(B, target), 0, -1):
        if B % tb == 0 and (tb == B or tb % 8 == 0):
            return tb
    return B


def _pack_params(params, D, H):
    """Pack the 23 module parameters into 4 bf16 matmul slabs + 2 small f32 slabs."""
    f32, bf16 = jnp.float32, jnp.bfloat16
    W1t = params["lin1_w"].T.astype(f32)     # (7D+2, H)
    # z() concat-group order: [c, m, q, c*q, c*m, |c-q|, |c-m|, dot_q, dot_m]
    attw = params["att_w"].astype(bf16)                              # (D, D)
    w1_slab = jnp.concatenate(
        [W1t[0:D], W1t[3 * D:4 * D], W1t[5 * D:6 * D],               # [c, c*q, |c-q|]
         W1t[2 * D:3 * D],                                           # [q] (hoisted)
         W1t[4 * D:5 * D], W1t[6 * D:7 * D]],                        # [c*m, |c-m|]
        axis=0).astype(bf16)                                         # (6D, H)
    w_mgh = jnp.concatenate(
        [W1t[D:2 * D], params["gru_w_hh"].T], axis=1).astype(bf16)   # (D, H+3D)
    w_gi = params["gru_w_ih"].T.astype(bf16)                         # (D, 3D)

    misc = jnp.zeros((8, H), f32)
    misc = misc.at[0].set(W1t[7 * D])            # dot_q row
    misc = misc.at[1].set(W1t[7 * D + 1])        # dot_m row
    misc = misc.at[2].set(params["lin1_b"])
    misc = misc.at[3].set(params["lin2_w"][0])   # score weight as a row
    # lin2_b dropped: softmax(s + b) == softmax(s).

    gbias = jnp.zeros((8, 3 * D), f32)
    gbias = gbias.at[0].set(params["gru_b_ih"])
    gbias = gbias.at[1].set(params["gru_b_hh"])
    return attw, w1_slab, w_mgh, w_gi, misc, gbias


def emm_forward(c, q, len_c, params, tb=None):
    B, L, D = c.shape
    H = params["lin1_w"].shape[0]
    tb = _pick_tb(B, L) if tb is None else tb
    assert B % tb == 0, "batch tile must divide B"
    grid = (B // tb,)

    attw, w1_slab, w_mgh, w_gi, misc, gbias = _pack_params(params, D, H)
    len2 = len_c.reshape(B, 1).astype(jnp.int32)

    in_specs = [
        pl.BlockSpec((tb, L, D), lambda g: (g, 0, 0)),
        pl.BlockSpec((tb, 1, D), lambda g: (g, 0, 0)),
        pl.BlockSpec((tb, 1), lambda g: (g, 0)),
        pl.BlockSpec((D, D), lambda g: (0, 0)),
        pl.BlockSpec((6 * D, H), lambda g: (0, 0)),
        pl.BlockSpec((D, H + 3 * D), lambda g: (0, 0)),
        pl.BlockSpec((D, 3 * D), lambda g: (0, 0)),
        pl.BlockSpec((8, H), lambda g: (0, 0)),
        pl.BlockSpec((8, 3 * D), lambda g: (0, 0)),
    ]
    out_specs = (
        pl.BlockSpec((tb, D), lambda g: (g, 0)),
        pl.BlockSpec((MEM_COUNT, tb, L), lambda g: (0, g, 0)),
    )
    out_shape = (
        jax.ShapeDtypeStruct((B, D), jnp.float32),
        jax.ShapeDtypeStruct((MEM_COUNT, B, L), jnp.float32),
    )

    m_out, att_ld = pl.pallas_call(
        _emm_kernel,
        grid=grid,
        in_specs=in_specs,
        out_specs=out_specs,
        out_shape=out_shape,
        compiler_params=pltpu.CompilerParams(dimension_semantics=("parallel",)),
    )(c, q, len2, attw, w1_slab, w_mgh, w_gi, misc, gbias)

    # mirror PyTorch return: (m.squeeze(), [att_hop0, att_hop1, att_hop2]) with (B, L, 1) hops
    att_list = [att_ld[t][:, :, None] for t in range(MEM_COUNT)]
    return m_out, att_list


def emm_reference(c, q, len_c, params):
    """Pure-JAX float32 reference mirroring the PyTorch forward."""
    B, L, D = c.shape
    W1, b1 = params["lin1_w"], params["lin1_b"]
    W2, b2 = params["lin2_w"], params["lin2_b"]
    Wa = params["att_w"]
    w_ih, w_hh = params["gru_w_ih"], params["gru_w_hh"]
    b_ih, b_hh = params["gru_b_ih"], params["gru_b_hh"]

    m = q
    atts = []
    mask = (jnp.arange(L)[None, :, None] < len_c[:, None, None])
    for _ in range(MEM_COUNT):
        dot_q = jnp.einsum("bld,de,bse->bls", c, Wa, q)
        dot_m = jnp.einsum("bld,de,bse->bls", c, Wa, m)
        qb = jnp.broadcast_to(q, (B, L, D))
        mb = jnp.broadcast_to(m, (B, L, D))
        z = jnp.concatenate([c, mb, qb, c * q, c * m,
                             jnp.abs(c - q), jnp.abs(c - m), dot_q, dot_m], axis=2)
        h = jnp.tanh(z @ W1.T + b1)
        s = h @ W2.T + b2                                   # (B, L, 1)
        s = jnp.where(mask, s, -jnp.inf)
        sm = jax.nn.softmax(s, axis=1)
        sm = jnp.where(mask, sm, 0.0)
        atts.append(sm)
        e = jnp.sum(c * sm, axis=1)                         # (B, D)
        hprev = m[:, 0]
        gi = e @ w_ih.T + b_ih
        gh = hprev @ w_hh.T + b_hh
        r = jax.nn.sigmoid(gi[:, :D] + gh[:, :D])
        zg = jax.nn.sigmoid(gi[:, D:2 * D] + gh[:, D:2 * D])
        n = jnp.tanh(gi[:, 2 * D:] + r * gh[:, 2 * D:])
        m = ((1.0 - zg) * n + zg * hprev)[:, None, :]
    return m[:, 0], jnp.stack(atts, axis=0)


def init_params(key, D, H):
    ks = jax.random.split(key, 9)
    u = lambda k, shape, a: jax.random.uniform(k, shape, jnp.float32, -a, a)
    s1 = 1.0 / np.sqrt(7 * D + 2)
    s2 = 1.0 / np.sqrt(H)
    sg = 1.0 / np.sqrt(D)
    return dict(
        att_w=u(ks[0], (D, D), 0.05),
        lin1_w=u(ks[1], (H, 7 * D + 2), s1),
        lin1_b=u(ks[2], (H,), s1),
        lin2_w=u(ks[3], (1, H), s2),
        lin2_b=u(ks[4], (1,), s2),
        gru_w_ih=u(ks[5], (3 * D, D), sg),
        gru_w_hh=u(ks[6], (3 * D, D), sg),
        gru_b_ih=u(ks[7], (3 * D,), sg),
        gru_b_hh=u(ks[8], (3 * D,), sg),
    )


if __name__ == "__main__":
    B, L, D, H = 4, 8, 32, 32                 # batch, seq, input_size, hidden_size
    key = jax.random.PRNGKey(0)
    kc, kq, kp = jax.random.split(key, 3)

    c = jax.random.normal(kc, (B, L, D), jnp.float32)
    q = jax.random.normal(kq, (B, 1, D), jnp.float32)
    len_c = jnp.array([L, 5, L, 3], dtype=jnp.int32)   # max(len_c) == L (module requirement)
    params = init_params(kp, D, H)

    m_out, att_list = emm_forward(c, q, len_c, params)
    m_out = jax.block_until_ready(m_out)
    att_stack = jax.block_until_ready(jnp.stack(att_list, axis=0))

    # float32 "highest"-precision reference; kernel uses bf16 MXU operands with
    # f32 accumulation + EUP approx reciprocal, so compare at 1e-2.
    with jax.default_matmul_precision("highest"):
        m_ref, att_ref = emm_reference(c, q, len_c, params)
    np.testing.assert_allclose(np.asarray(m_out), np.asarray(m_ref), rtol=1e-2, atol=1e-2)
    np.testing.assert_allclose(np.asarray(att_stack), np.asarray(att_ref), rtol=1e-2, atol=1e-2)

    print("KERNEL_OK")
</pallas_src>

<mosaic_0001>
module attributes {stable_mosaic.version = 11 : i64} {
  func.func @_emm_kernel(%arg0: i32, %arg1: memref<4x8x32xf32, #tpu.memory_space<vmem>>, %arg2: memref<4x1x32xf32, #tpu.memory_space<vmem>>, %arg3: memref<4x1xi32, #tpu.memory_space<vmem>>, %arg4: memref<32x32xbf16, #tpu.memory_space<vmem>>, %arg5: memref<192x32xbf16, #tpu.memory_space<vmem>>, %arg6: memref<32x128xbf16, #tpu.memory_space<vmem>>, %arg7: memref<32x96xbf16, #tpu.memory_space<vmem>>, %arg8: memref<8x32xf32, #tpu.memory_space<vmem>>, %arg9: memref<8x96xf32, #tpu.memory_space<vmem>>, %arg10: memref<4x32xf32, #tpu.memory_space<vmem>>, %arg11: memref<3x4x8xf32, #tpu.memory_space<vmem>>) attributes {dimension_semantics = [#tpu.dimension_semantics<parallel>], iteration_bounds = array<i64: 1>, scalar_prefetch = 0 : i64, scratch_operands = 0 : i64, tpu.core_type = #tpu.core_type<tc>, window_params = [{transform_indices = @transform_0, window_bounds = array<i64: 4, 8, 32>}, {transform_indices = @transform_1, window_bounds = array<i64: 4, 1, 32>}, {transform_indices = @transform_2, window_bounds = array<i64: 4, 1>}, {pipeline_mode = #tpu.pipeline_mode<synchronous>, transform_indices = @transform_3, window_bounds = array<i64: 32, 32>}, {pipeline_mode = #tpu.pipeline_mode<synchronous>, transform_indices = @transform_4, window_bounds = array<i64: 192, 32>}, {pipeline_mode = #tpu.pipeline_mode<synchronous>, transform_indices = @transform_5, window_bounds = array<i64: 32, 128>}, {pipeline_mode = #tpu.pipeline_mode<synchronous>, transform_indices = @transform_6, window_bounds = array<i64: 32, 96>}, {pipeline_mode = #tpu.pipeline_mode<synchronous>, transform_indices = @transform_7, window_bounds = array<i64: 8, 32>}, {pipeline_mode = #tpu.pipeline_mode<synchronous>, transform_indices = @transform_8, window_bounds = array<i64: 8, 96>}, {transform_indices = @transform_9, window_bounds = array<i64: 4, 32>}, {transform_indices = @transform_10, window_bounds = array<i64: 3, 4, 8>}]} {
    %c0 = arith.constant 0 : index
    %c0_0 = arith.constant 0 : index
    %c0_1 = arith.constant 0 : index
    %0 = vector.load %arg1[%c0, %c0_0, %c0_1] : memref<4x8x32xf32, #tpu.memory_space<vmem>>, vector<4x8x32xf32>
    %c0_2 = arith.constant 0 : index
    %c0_3 = arith.constant 0 : index
    %c0_4 = arith.constant 0 : index
    %1 = vector.load %arg2[%c0_2, %c0_3, %c0_4] : memref<4x1x32xf32, #tpu.memory_space<vmem>>, vector<4x1x32xf32>
    %c0_5 = arith.constant 0 : index
    %c0_6 = arith.constant 0 : index
    %2 = vector.load %arg3[%c0_5, %c0_6] : memref<4x1xi32, #tpu.memory_space<vmem>>, vector<4x1xi32>
    %c0_7 = arith.constant 0 : index
    %c0_8 = arith.constant 0 : index
    %3 = vector.load %arg4[%c0_7, %c0_8] : memref<32x32xbf16, #tpu.memory_space<vmem>>, vector<32x32xbf16>
    %c0_9 = arith.constant 0 : index
    %c0_10 = arith.constant 0 : index
    %4 = vector.load %arg5[%c0_9, %c0_10] : memref<192x32xbf16, #tpu.memory_space<vmem>>, vector<96x32xbf16>
    %c96 = arith.constant 96 : index
    %c0_11 = arith.constant 0 : index
    %5 = vector.load %arg5[%c96, %c0_11] : memref<192x32xbf16, #tpu.memory_space<vmem>>, vector<32x32xbf16>
    %c128 = arith.constant 128 : index
    %c0_12 = arith.constant 0 : index
    %6 = vector.load %arg5[%c128, %c0_12] : memref<192x32xbf16, #tpu.memory_space<vmem>>, vector<64x32xbf16>
    %c0_13 = arith.constant 0 : index
    %c0_14 = arith.constant 0 : index
    %7 = vector.load %arg6[%c0_13, %c0_14] : memref<32x128xbf16, #tpu.memory_space<vmem>>, vector<32x128xbf16>
    %c0_15 = arith.constant 0 : index
    %c0_16 = arith.constant 0 : index
    %8 = vector.load %arg7[%c0_15, %c0_16] : memref<32x96xbf16, #tpu.memory_space<vmem>>, vector<32x96xbf16>
    %c0_17 = arith.constant 0 : index
    %c0_18 = arith.constant 0 : index
    %9 = vector.load %arg8[%c0_17, %c0_18] : memref<8x32xf32, #tpu.memory_space<vmem>>, vector<8x32xf32>
    %10 = vector.extract_strided_slice %9 {offsets = [0, 0], sizes = [1, 32], strides = [1, 1]} : vector<8x32xf32> to vector<1x32xf32>
    %11 = vector.extract_strided_slice %9 {offsets = [1, 0], sizes = [1, 32], strides = [1, 1]} : vector<8x32xf32> to vector<1x32xf32>
    %12 = vector.extract_strided_slice %9 {offsets = [2, 0], sizes = [1, 32], strides = [1, 1]} : vector<8x32xf32> to vector<1x32xf32>
    %13 = vector.extract_strided_slice %9 {offsets = [3, 0], sizes = [1, 32], strides = [1, 1]} : vector<8x32xf32> to vector<1x32xf32>
    %c0_19 = arith.constant 0 : index
    %c0_20 = arith.constant 0 : index
    %14 = vector.load %arg9[%c0_19, %c0_20] : memref<8x96xf32, #tpu.memory_space<vmem>>, vector<8x96xf32>
    %15 = vector.extract_strided_slice %14 {offsets = [0, 0], sizes = [1, 96], strides = [1, 1]} : vector<8x96xf32> to vector<1x96xf32>
    %16 = vector.extract_strided_slice %14 {offsets = [1, 0], sizes = [1, 96], strides = [1, 1]} : vector<8x96xf32> to vector<1x96xf32>
    %17 = vector.shape_cast %0 : vector<4x8x32xf32> to vector<32x32xf32>
    %18 = arith.truncf %17 : vector<32x32xf32> to vector<32x32xbf16>
    %cst = arith.constant dense<0.000000e+00> : vector<32x32xf32>
    %19 = tpu.matmul %18, %3, %cst {dimension_numbers = #tpu.dot_dimension_numbers<[1], [0], [0], [1], [0, 0, 1, 1], [], []>} : vector<32x32xbf16>, vector<32x32xbf16>, vector<32x32xf32> -> vector<32x32xf32>
    %20 = vector.shape_cast %19 : vector<32x32xf32> to vector<4x8x32xf32>
    %21 = vector.broadcast %1 : vector<4x1x32xf32> to vector<4x8x32xf32>
    %22 = arith.mulf %20, %21 : vector<4x8x32xf32>
    %cst_21 = arith.constant dense<0.000000e+00> : vector<4x8xf32>
    %23 = vector.multi_reduction <add>, %22, %cst_21 [2] : vector<4x8x32xf32> to vector<4x8xf32>
    %24 = vector.shape_cast %23 : vector<4x8xf32> to vector<4x8x1xf32>
    %25 = vector.shape_cast %1 : vector<4x1x32xf32> to vector<4x32xf32>
    %26 = vector.broadcast %1 : vector<4x1x32xf32> to vector<4x8x32xf32>
    %27 = arith.mulf %0, %26 : vector<4x8x32xf32>
    %28 = vector.broadcast %1 : vector<4x1x32xf32> to vector<4x8x32xf32>
    %29 = arith.subf %0, %28 : vector<4x8x32xf32>
    %30 = math.absf %29 : vector<4x8x32xf32>
    %31 = tpu.concatenate %0, %27, %30 in 2 : vector<4x8x32xf32>, vector<4x8x32xf32>, vector<4x8x32xf32> -> vector<4x8x96xf32>
    %32 = vector.shape_cast %31 : vector<4x8x96xf32> to vector<32x96xf32>
    %33 = arith.truncf %32 : vector<32x96xf32> to vector<32x96xbf16>
    %cst_22 = arith.constant dense<0.000000e+00> : vector<32x32xf32>
    %34 = tpu.matmul %33, %4, %cst_22 {dimension_numbers = #tpu.dot_dimension_numbers<[1], [0], [0], [1], [0, 0, 1, 1], [], []>} : vector<32x96xbf16>, vector<96x32xbf16>, vector<32x32xf32> -> vector<32x32xf32>
    %35 = vector.shape_cast %34 : vector<32x32xf32> to vector<4x8x32xf32>
    %36 = arith.truncf %25 : vector<4x32xf32> to vector<4x32xbf16>
    %cst_23 = arith.constant dense<0.000000e+00> : vector<4x32xf32>
    %37 = tpu.matmul %36, %5, %cst_23 {dimension_numbers = #tpu.dot_dimension_numbers<[1], [0], [0], [1], [0, 0, 1, 1], [], []>} : vector<4x32xbf16>, vector<32x32xbf16>, vector<4x32xf32> -> vector<4x32xf32>
    %38 = vector.shape_cast %37 : vector<4x32xf32> to vector<4x1x32xf32>
    %39 = vector.broadcast %38 : vector<4x1x32xf32> to vector<4x8x32xf32>
    %40 = arith.addf %35, %39 : vector<4x8x32xf32>
    %41 = vector.shape_cast %10 : vector<1x32xf32> to vector<1x1x32xf32>
    %42 = vector.broadcast %24 : vector<4x8x1xf32> to vector<4x8x32xf32>
    %43 = vector.broadcast %41 : vector<1x1x32xf32> to vector<4x8x32xf32>
    %44 = arith.mulf %42, %43 : vector<4x8x32xf32>
    %45 = arith.addf %40, %44 : vector<4x8x32xf32>
    %46 = vector.shape_cast %12 : vector<1x32xf32> to vector<1x1x32xf32>
    %47 = vector.broadcast %46 : vector<1x1x32xf32> to vector<4x8x32xf32>
    %48 = arith.addf %45, %47 : vector<4x8x32xf32>
    %49 = tpu.iota {dimensions = array<i32: 1>} : vector<4x8xi32>
    %50 = vector.broadcast %2 : vector<4x1xi32> to vector<4x8xi32>
    %51 = arith.cmpi slt, %49, %50 : vector<4x8xi32>
    %52 = vector.shape_cast %1 : vector<4x1x32xf32> to vector<4x32xf32>
    %53 = arith.truncf %52 : vector<4x32xf32> to vector<4x32xbf16>
    %cst_24 = arith.constant dense<0.000000e+00> : vector<4x128xf32>
    %54 = tpu.matmul %53, %7, %cst_24 {dimension_numbers = #tpu.dot_dimension_numbers<[1], [0], [0], [1], [0, 0, 1, 1], [], []>} : vector<4x32xbf16>, vector<32x128xbf16>, vector<4x128xf32> -> vector<4x128xf32>
    %55 = vector.extract_strided_slice %54 {offsets = [0, 0], sizes = [4, 32], strides = [1, 1]} : vector<4x128xf32> to vector<4x32xf32>
    %56 = vector.extract_strided_slice %54 {offsets = [0, 32], sizes = [4, 96], strides = [1, 1]} : vector<4x128xf32> to vector<4x96xf32>
    %57 = vector.broadcast %16 : vector<1x96xf32> to vector<4x96xf32>
    %58 = arith.addf %56, %57 : vector<4x96xf32>
    %59 = vector.broadcast %1 : vector<4x1x32xf32> to vector<4x8x32xf32>
    %60 = arith.mulf %20, %59 : vector<4x8x32xf32>
    %cst_25 = arith.constant dense<0.000000e+00> : vector<4x8xf32>
    %61 = vector.multi_reduction <add>, %60, %cst_25 [2] : vector<4x8x32xf32> to vector<4x8xf32>
    %62 = vector.shape_cast %61 : vector<4x8xf32> to vector<4x8x1xf32>
    %63 = vector.broadcast %1 : vector<4x1x32xf32> to vector<4x8x32xf32>
    %64 = arith.mulf %0, %63 : vector<4x8x32xf32>
    %65 = vector.broadcast %1 : vector<4x1x32xf32> to vector<4x8x32xf32>
    %66 = arith.subf %0, %65 : vector<4x8x32xf32>
    %67 = math.absf %66 : vector<4x8x32xf32>
    %68 = tpu.concatenate %64, %67 in 2 : vector<4x8x32xf32>, vector<4x8x32xf32> -> vector<4x8x64xf32>
    %69 = vector.shape_cast %55 : vector<4x32xf32> to vector<4x1x32xf32>
    %70 = vector.broadcast %69 : vector<4x1x32xf32> to vector<4x8x32xf32>
    %71 = arith.addf %48, %70 : vector<4x8x32xf32>
    %72 = vector.shape_cast %11 : vector<1x32xf32> to vector<1x1x32xf32>
    %73 = vector.broadcast %62 : vector<4x8x1xf32> to vector<4x8x32xf32>
    %74 = vector.broadcast %72 : vector<1x1x32xf32> to vector<4x8x32xf32>
    %75 = arith.mulf %73, %74 : vector<4x8x32xf32>
    %76 = arith.addf %71, %75 : vector<4x8x32xf32>
    %77 = vector.shape_cast %68 : vector<4x8x64xf32> to vector<32x64xf32>
    %78 = arith.truncf %77 : vector<32x64xf32> to vector<32x64xbf16>
    %cst_26 = arith.constant dense<0.000000e+00> : vector<32x32xf32>
    %79 = tpu.matmul %78, %6, %cst_26 {dimension_numbers = #tpu.dot_dimension_numbers<[1], [0], [0], [1], [0, 0, 1, 1], [], []>} : vector<32x64xbf16>, vector<64x32xbf16>, vector<32x32xf32> -> vector<32x32xf32>
    %80 = vector.shape_cast %79 : vector<32x32xf32> to vector<4x8x32xf32>
    %81 = arith.addf %76, %80 : vector<4x8x32xf32>
    %82 = math.tanh %81 : vector<4x8x32xf32>
    %83 = vector.shape_cast %13 : vector<1x32xf32> to vector<1x1x32xf32>
    %84 = vector.broadcast %83 : vector<1x1x32xf32> to vector<4x8x32xf32>
    %85 = arith.mulf %82, %84 : vector<4x8x32xf32>
    %cst_27 = arith.constant dense<0.000000e+00> : vector<4x8xf32>
    %86 = vector.multi_reduction <add>, %85, %cst_27 [2] : vector<4x8x32xf32> to vector<4x8xf32>
    %cst_28 = arith.constant 0xFF800000 : f32
    %87 = vector.broadcast %cst_28 : f32 to vector<4x8xf32>
    %88 = arith.select %51, %86, %87 : vector<4x8xi1>, vector<4x8xf32>
    %cst_29 = arith.constant dense<0xFF800000> : vector<4xf32>
    %89 = vector.multi_reduction <maximumf>, %88, %cst_29 [1] : vector<4x8xf32> to vector<4xf32>
    %90 = vector.shape_cast %89 : vector<4xf32> to vector<4x1xf32>
    %91 = vector.broadcast %90 : vector<4x1xf32> to vector<4x8xf32>
    %92 = arith.subf %88, %91 : vector<4x8xf32>
    %93 = math.exp %92 : vector<4x8xf32>
    %cst_30 = arith.constant 0.000000e+00 : f32
    %94 = vector.broadcast %cst_30 : f32 to vector<4x8xf32>
    %95 = arith.select %51, %93, %94 : vector<4x8xi1>, vector<4x8xf32>
    %cst_31 = arith.constant dense<0.000000e+00> : vector<4xf32>
    %96 = vector.multi_reduction <add>, %95, %cst_31 [1] : vector<4x8xf32> to vector<4xf32>
    %97 = vector.shape_cast %96 : vector<4xf32> to vector<4x1xf32>
    %98 = tpu.reciprocal %97 {approx = true} : vector<4x1xf32> -> vector<4x1xf32>
    %99 = vector.broadcast %98 : vector<4x1xf32> to vector<4x8xf32>
    %100 = arith.mulf %95, %99 : vector<4x8xf32>
    %101 = vector.shape_cast %100 : vector<4x8xf32> to vector<4x8x1xf32>
    %102 = vector.broadcast %101 : vector<4x8x1xf32> to vector<4x8x32xf32>
    %103 = arith.mulf %0, %102 : vector<4x8x32xf32>
    %cst_32 = arith.constant dense<0.000000e+00> : vector<4x32xf32>
    %104 = vector.multi_reduction <add>, %103, %cst_32 [1] : vector<4x8x32xf32> to vector<4x32xf32>
    %105 = arith.truncf %104 : vector<4x32xf32> to vector<4x32xbf16>
    %cst_33 = arith.constant dense<0.000000e+00> : vector<4x96xf32>
    %106 = tpu.matmul %105, %8, %cst_33 {dimension_numbers = #tpu.dot_dimension_numbers<[1], [0], [0], [1], [0, 0, 1, 1], [], []>} : vector<4x32xbf16>, vector<32x96xbf16>, vector<4x96xf32> -> vector<4x96xf32>
    %107 = vector.broadcast %15 : vector<1x96xf32> to vector<4x96xf32>
    %108 = arith.addf %106, %107 : vector<4x96xf32>
    %109 = vector.extract_strided_slice %108 {offsets = [0, 0], sizes = [4, 32], strides = [1, 1]} : vector<4x96xf32> to vector<4x32xf32>
    %110 = vector.extract_strided_slice %58 {offsets = [0, 0], sizes = [4, 32], strides = [1, 1]} : vector<4x96xf32> to vector<4x32xf32>
    %111 = arith.addf %109, %110 : vector<4x32xf32>
    %112 = arith.negf %111 : vector<4x32xf32>
    %113 = math.exp %112 : vector<4x32xf32>
    %cst_34 = arith.constant 1.000000e+00 : f32
    %114 = vector.broadcast %cst_34 : f32 to vector<4x32xf32>
    %115 = arith.addf %114, %113 : vector<4x32xf32>
    %116 = arith.divf %114, %115 : vector<4x32xf32>
    %117 = vector.extract_strided_slice %108 {offsets = [0, 32], sizes = [4, 32], strides = [1, 1]} : vector<4x96xf32> to vector<4x32xf32>
    %118 = vector.extract_strided_slice %58 {offsets = [0, 32], sizes = [4, 32], strides = [1, 1]} : vector<4x96xf32> to vector<4x32xf32>
    %119 = arith.addf %117, %118 : vector<4x32xf32>
    %120 = arith.negf %119 : vector<4x32xf32>
    %121 = math.exp %120 : vector<4x32xf32>
    %cst_35 = arith.constant 1.000000e+00 : f32
    %122 = vector.broadcast %cst_35 : f32 to vector<4x32xf32>
    %123 = arith.addf %122, %121 : vector<4x32xf32>
    %124 = arith.divf %122, %123 : vector<4x32xf32>
    %125 = vector.extract_strided_slice %108 {offsets = [0, 64], sizes = [4, 32], strides = [1, 1]} : vector<4x96xf32> to vector<4x32xf32>
    %126 = vector.extract_strided_slice %58 {offsets = [0, 64], sizes = [4, 32], strides = [1, 1]} : vector<4x96xf32> to vector<4x32xf32>
    %127 = arith.mulf %116, %126 : vector<4x32xf32>
    %128 = arith.addf %125, %127 : vector<4x32xf32>
    %129 = math.tanh %128 : vector<4x32xf32>
    %cst_36 = arith.constant 1.000000e+00 : f32
    %130 = vector.broadcast %cst_36 : f32 to vector<4x32xf32>
    %131 = arith.subf %130, %124 : vector<4x32xf32>
    %132 = arith.mulf %131, %129 : vector<4x32xf32>
    %133 = arith.mulf %124, %52 : vector<4x32xf32>
    %134 = arith.addf %132, %133 : vector<4x32xf32>
    %135 = vector.shape_cast %134 : vector<4x32xf32> to vector<4x1x32xf32>
    %136 = vector.shape_cast %135 : vector<4x1x32xf32> to vector<4x32xf32>
    %137 = arith.truncf %136 : vector<4x32xf32> to vector<4x32xbf16>
    %cst_37 = arith.constant dense<0.000000e+00> : vector<4x128xf32>
    %138 = tpu.matmul %137, %7, %cst_37 {dimension_numbers = #tpu.dot_dimension_numbers<[1], [0], [0], [1], [0, 0, 1, 1], [], []>} : vector<4x32xbf16>, vector<32x128xbf16>, vector<4x128xf32> -> vector<4x128xf32>
    %139 = vector.extract_strided_slice %138 {offsets = [0, 0], sizes = [4, 32], strides = [1, 1]} : vector<4x128xf32> to vector<4x32xf32>
    %140 = vector.extract_strided_slice %138 {offsets = [0, 32], sizes = [4, 96], strides = [1, 1]} : vector<4x128xf32> to vector<4x96xf32>
    %141 = vector.broadcast %16 : vector<1x96xf32> to vector<4x96xf32>
    %142 = arith.addf %140, %141 : vector<4x96xf32>
    %143 = vector.broadcast %135 : vector<4x1x32xf32> to vector<4x8x32xf32>
    %144 = arith.mulf %20, %143 : vector<4x8x32xf32>
    %cst_38 = arith.constant dense<0.000000e+00> : vector<4x8xf32>
    %145 = vector.multi_reduction <add>, %144, %cst_38 [2] : vector<4x8x32xf32> to vector<4x8xf32>
    %146 = vector.shape_cast %145 : vector<4x8xf32> to vector<4x8x1xf32>
    %147 = vector.broadcast %135 : vector<4x1x32xf32> to vector<4x8x32xf32>
    %148 = arith.mulf %0, %147 : vector<4x8x32xf32>
    %149 = vector.broadcast %135 : vector<4x1x32xf32> to vector<4x8x32xf32>
    %150 = arith.subf %0, %149 : vector<4x8x32xf32>
    %151 = math.absf %150 : vector<4x8x32xf32>
    %152 = tpu.concatenate %148, %151 in 2 : vector<4x8x32xf32>, vector<4x8x32xf32> -> vector<4x8x64xf32>
    %153 = vector.shape_cast %139 : vector<4x32xf32> to vector<4x1x32xf32>
    %154 = vector.broadcast %153 : vector<4x1x32xf32> to vector<4x8x32xf32>
    %155 = arith.addf %48, %154 : vector<4x8x32xf32>
    %156 = vector.shape_cast %11 : vector<1x32xf32> to vector<1x1x32xf32>
    %157 = vector.broadcast %146 : vector<4x8x1xf32> to vector<4x8x32xf32>
    %158 = vector.broadcast %156 : vector<1x1x32xf32> to vector<4x8x32xf32>
    %159 = arith.mulf %157, %158 : vector<4x8x32xf32>
    %160 = arith.addf %155, %159 : vector<4x8x32xf32>
    %161 = vector.shape_cast %152 : vector<4x8x64xf32> to vector<32x64xf32>
    %162 = arith.truncf %161 : vector<32x64xf32> to vector<32x64xbf16>
    %cst_39 = arith.constant dense<0.000000e+00> : vector<32x32xf32>
    %163 = tpu.matmul %162, %6, %cst_39 {dimension_numbers = #tpu.dot_dimension_numbers<[1], [0], [0], [1], [0, 0, 1, 1], [], []>} : vector<32x64xbf16>, vector<64x32xbf16>, vector<32x32xf32> -> vector<32x32xf32>
    %164 = vector.shape_cast %163 : vector<32x32xf32> to vector<4x8x32xf32>
    %165 = arith.addf %160, %164 : vector<4x8x32xf32>
    %166 = math.tanh %165 : vector<4x8x32xf32>
    %167 = vector.shape_cast %13 : vector<1x32xf32> to vector<1x1x32xf32>
    %168 = vector.broadcast %167 : vector<1x1x32xf32> to vector<4x8x32xf32>
    %169 = arith.mulf %166, %168 : vector<4x8x32xf32>
    %cst_40 = arith.constant dense<0.000000e+00> : vector<4x8xf32>
    %170 = vector.multi_reduction <add>, %169, %cst_40 [2] : vector<4x8x32xf32> to vector<4x8xf32>
    %cst_41 = arith.constant 0xFF800000 : f32
    %171 = vector.broadcast %cst_41 : f32 to vector<4x8xf32>
    %172 = arith.select %51, %170, %171 : vector<4x8xi1>, vector<4x8xf32>
    %cst_42 = arith.constant dense<0xFF800000> : vector<4xf32>
    %173 = vector.multi_reduction <maximumf>, %172, %cst_42 [1] : vector<4x8xf32> to vector<4xf32>
    %174 = vector.shape_cast %173 : vector<4xf32> to vector<4x1xf32>
    %175 = vector.broadcast %174 : vector<4x1xf32> to vector<4x8xf32>
    %176 = arith.subf %172, %175 : vector<4x8xf32>
    %177 = math.exp %176 : vector<4x8xf32>
    %cst_43 = arith.constant 0.000000e+00 : f32
    %178 = vector.broadcast %cst_43 : f32 to vector<4x8xf32>
    %179 = arith.select %51, %177, %178 : vector<4x8xi1>, vector<4x8xf32>
    %cst_44 = arith.constant dense<0.000000e+00> : vector<4xf32>
    %180 = vector.multi_reduction <add>, %179, %cst_44 [1] : vector<4x8xf32> to vector<4xf32>
    %181 = vector.shape_cast %180 : vector<4xf32> to vector<4x1xf32>
    %182 = tpu.reciprocal %181 {approx = true} : vector<4x1xf32> -> vector<4x1xf32>
    %183 = vector.broadcast %182 : vector<4x1xf32> to vector<4x8xf32>
    %184 = arith.mulf %179, %183 : vector<4x8xf32>
    %185 = vector.shape_cast %184 : vector<4x8xf32> to vector<4x8x1xf32>
    %186 = vector.broadcast %185 : vector<4x8x1xf32> to vector<4x8x32xf32>
    %187 = arith.mulf %0, %186 : vector<4x8x32xf32>
    %cst_45 = arith.constant dense<0.000000e+00> : vector<4x32xf32>
    %188 = vector.multi_reduction <add>, %187, %cst_45 [1] : vector<4x8x32xf32> to vector<4x32xf32>
    %189 = arith.truncf %188 : vector<4x32xf32> to vector<4x32xbf16>
    %cst_46 = arith.constant dense<0.000000e+00> : vector<4x96xf32>
    %190 = tpu.matmul %189, %8, %cst_46 {dimension_numbers = #tpu.dot_dimension_numbers<[1], [0], [0], [1], [0, 0, 1, 1], [], []>} : vector<4x32xbf16>, vector<32x96xbf16>, vector<4x96xf32> -> vector<4x96xf32>
    %191 = vector.broadcast %15 : vector<1x96xf32> to vector<4x96xf32>
    %192 = arith.addf %190, %191 : vector<4x96xf32>
    %193 = vector.extract_strided_slice %192 {offsets = [0, 0], sizes = [4, 32], strides = [1, 1]} : vector<4x96xf32> to vector<4x32xf32>
    %194 = vector.extract_strided_slice %142 {offsets = [0, 0], sizes = [4, 32], strides = [1, 1]} : vector<4x96xf32> to vector<4x32xf32>
    %195 = arith.addf %193, %194 : vector<4x32xf32>
    %196 = arith.negf %195 : vector<4x32xf32>
    %197 = math.exp %196 : vector<4x32xf32>
    %cst_47 = arith.constant 1.000000e+00 : f32
    %198 = vector.broadcast %cst_47 : f32 to vector<4x32xf32>
    %199 = arith.addf %198, %197 : vector<4x32xf32>
    %200 = arith.divf %198, %199 : vector<4x32xf32>
    %201 = vector.extract_strided_slice %192 {offsets = [0, 32], sizes = [4, 32], strides = [1, 1]} : vector<4x96xf32> to vector<4x32xf32>
    %202 = vector.extract_strided_slice %142 {offsets = [0, 32], sizes = [4, 32], strides = [1, 1]} : vector<4x96xf32> to vector<4x32xf32>
    %203 = arith.addf %201, %202 : vector<4x32xf32>
    %204 = arith.negf %203 : vector<4x32xf32>
    %205 = math.exp %204 : vector<4x32xf32>
    %cst_48 = arith.constant 1.000000e+00 : f32
    %206 = vector.broadcast %cst_48 : f32 to vector<4x32xf32>
    %207 = arith.addf %206, %205 : vector<4x32xf32>
    %208 = arith.divf %206, %207 : vector<4x32xf32>
    %209 = vector.extract_strided_slice %192 {offsets = [0, 64], sizes = [4, 32], strides = [1, 1]} : vector<4x96xf32> to vector<4x32xf32>
    %210 = vector.extract_strided_slice %142 {offsets = [0, 64], sizes = [4, 32], strides = [1, 1]} : vector<4x96xf32> to vector<4x32xf32>
    %211 = arith.mulf %200, %210 : vector<4x32xf32>
    %212 = arith.addf %209, %211 : vector<4x32xf32>
    %213 = math.tanh %212 : vector<4x32xf32>
    %cst_49 = arith.constant 1.000000e+00 : f32
    %214 = vector.broadcast %cst_49 : f32 to vector<4x32xf32>
    %215 = arith.subf %214, %208 : vector<4x32xf32>
    %216 = arith.mulf %215, %213 : vector<4x32xf32>
    %217 = arith.mulf %208, %136 : vector<4x32xf32>
    %218 = arith.addf %216, %217 : vector<4x32xf32>
    %219 = vector.shape_cast %218 : vector<4x32xf32> to vector<4x1x32xf32>
    %220 = vector.shape_cast %219 : vector<4x1x32xf32> to vector<4x32xf32>
    %221 = arith.truncf %220 : vector<4x32xf32> to vector<4x32xbf16>
    %cst_50 = arith.constant dense<0.000000e+00> : vector<4x128xf32>
    %222 = tpu.matmul %221, %7, %cst_50 {dimension_numbers = #tpu.dot_dimension_numbers<[1], [0], [0], [1], [0, 0, 1, 1], [], []>} : vector<4x32xbf16>, vector<32x128xbf16>, vector<4x128xf32> -> vector<4x128xf32>
    %223 = vector.extract_strided_slice %222 {offsets = [0, 0], sizes = [4, 32], strides = [1, 1]} : vector<4x128xf32> to vector<4x32xf32>
    %224 = vector.extract_strided_slice %222 {offsets = [0, 32], sizes = [4, 96], strides = [1, 1]} : vector<4x128xf32> to vector<4x96xf32>
    %225 = vector.broadcast %16 : vector<1x96xf32> to vector<4x96xf32>
    %226 = arith.addf %224, %225 : vector<4x96xf32>
    %227 = vector.broadcast %219 : vector<4x1x32xf32> to vector<4x8x32xf32>
    %228 = arith.mulf %20, %227 : vector<4x8x32xf32>
    %cst_51 = arith.constant dense<0.000000e+00> : vector<4x8xf32>
    %229 = vector.multi_reduction <add>, %228, %cst_51 [2] : vector<4x8x32xf32> to vector<4x8xf32>
    %230 = vector.shape_cast %229 : vector<4x8xf32> to vector<4x8x1xf32>
    %231 = vector.broadcast %219 : vector<4x1x32xf32> to vector<4x8x32xf32>
    %232 = arith.mulf %0, %231 : vector<4x8x32xf32>
    %233 = vector.broadcast %219 : vector<4x1x32xf32> to vector<4x8x32xf32>
    %234 = arith.subf %0, %233 : vector<4x8x32xf32>
    %235 = math.absf %234 : vector<4x8x32xf32>
    %236 = tpu.concatenate %232, %235 in 2 : vector<4x8x32xf32>, vector<4x8x32xf32> -> vector<4x8x64xf32>
    %237 = vector.shape_cast %223 : vector<4x32xf32> to vector<4x1x32xf32>
    %238 = vector.broadcast %237 : vector<4x1x32xf32> to vector<4x8x32xf32>
    %239 = arith.addf %48, %238 : vector<4x8x32xf32>
    %240 = vector.shape_cast %11 : vector<1x32xf32> to vector<1x1x32xf32>
    %241 = vector.broadcast %230 : vector<4x8x1xf32> to vector<4x8x32xf32>
    %242 = vector.broadcast %240 : vector<1x1x32xf32> to vector<4x8x32xf32>
    %243 = arith.mulf %241, %242 : vector<4x8x32xf32>
    %244 = arith.addf %239, %243 : vector<4x8x32xf32>
    %245 = vector.shape_cast %236 : vector<4x8x64xf32> to vector<32x64xf32>
    %246 = arith.truncf %245 : vector<32x64xf32> to vector<32x64xbf16>
    %cst_52 = arith.constant dense<0.000000e+00> : vector<32x32xf32>
    %247 = tpu.matmul %246, %6, %cst_52 {dimension_numbers = #tpu.dot_dimension_numbers<[1], [0], [0], [1], [0, 0, 1, 1], [], []>} : vector<32x64xbf16>, vector<64x32xbf16>, vector<32x32xf32> -> vector<32x32xf32>
    %248 = vector.shape_cast %247 : vector<32x32xf32> to vector<4x8x32xf32>
    %249 = arith.addf %244, %248 : vector<4x8x32xf32>
    %250 = math.tanh %249 : vector<4x8x32xf32>
    %251 = vector.shape_cast %13 : vector<1x32xf32> to vector<1x1x32xf32>
    %252 = vector.broadcast %251 : vector<1x1x32xf32> to vector<4x8x32xf32>
    %253 = arith.mulf %250, %252 : vector<4x8x32xf32>
    %cst_53 = arith.constant dense<0.000000e+00> : vector<4x8xf32>
    %254 = vector.multi_reduction <add>, %253, %cst_53 [2] : vector<4x8x32xf32> to vector<4x8xf32>
    %cst_54 = arith.constant 0xFF800000 : f32
    %255 = vector.broadcast %cst_54 : f32 to vector<4x8xf32>
    %256 = arith.select %51, %254, %255 : vector<4x8xi1>, vector<4x8xf32>
    %cst_55 = arith.constant dense<0xFF800000> : vector<4xf32>
    %257 = vector.multi_reduction <maximumf>, %256, %cst_55 [1] : vector<4x8xf32> to vector<4xf32>
    %258 = vector.shape_cast %257 : vector<4xf32> to vector<4x1xf32>
    %259 = vector.broadcast %258 : vector<4x1xf32> to vector<4x8xf32>
    %260 = arith.subf %256, %259 : vector<4x8xf32>
    %261 = math.exp %260 : vector<4x8xf32>
    %cst_56 = arith.constant 0.000000e+00 : f32
    %262 = vector.broadcast %cst_56 : f32 to vector<4x8xf32>
    %263 = arith.select %51, %261, %262 : vector<4x8xi1>, vector<4x8xf32>
    %cst_57 = arith.constant dense<0.000000e+00> : vector<4xf32>
    %264 = vector.multi_reduction <add>, %263, %cst_57 [1] : vector<4x8xf32> to vector<4xf32>
    %265 = vector.shape_cast %264 : vector<4xf32> to vector<4x1xf32>
    %266 = tpu.reciprocal %265 {approx = true} : vector<4x1xf32> -> vector<4x1xf32>
    %267 = vector.broadcast %266 : vector<4x1xf32> to vector<4x8xf32>
    %268 = arith.mulf %263, %267 : vector<4x8xf32>
    %269 = vector.shape_cast %268 : vector<4x8xf32> to vector<4x8x1xf32>
    %270 = vector.broadcast %269 : vector<4x8x1xf32> to vector<4x8x32xf32>
    %271 = arith.mulf %0, %270 : vector<4x8x32xf32>
    %cst_58 = arith.constant dense<0.000000e+00> : vector<4x32xf32>
    %272 = vector.multi_reduction <add>, %271, %cst_58 [1] : vector<4x8x32xf32> to vector<4x32xf32>
    %273 = arith.truncf %272 : vector<4x32xf32> to vector<4x32xbf16>
    %cst_59 = arith.constant dense<0.000000e+00> : vector<4x96xf32>
    %274 = tpu.matmul %273, %8, %cst_59 {dimension_numbers = #tpu.dot_dimension_numbers<[1], [0], [0], [1], [0, 0, 1, 1], [], []>} : vector<4x32xbf16>, vector<32x96xbf16>, vector<4x96xf32> -> vector<4x96xf32>
    %275 = vector.broadcast %15 : vector<1x96xf32> to vector<4x96xf32>
    %276 = arith.addf %274, %275 : vector<4x96xf32>
    %277 = vector.extract_strided_slice %276 {offsets = [0, 0], sizes = [4, 32], strides = [1, 1]} : vector<4x96xf32> to vector<4x32xf32>
    %278 = vector.extract_strided_slice %226 {offsets = [0, 0], sizes = [4, 32], strides = [1, 1]} : vector<4x96xf32> to vector<4x32xf32>
    %279 = arith.addf %277, %278 : vector<4x32xf32>
    %280 = arith.negf %279 : vector<4x32xf32>
    %281 = math.exp %280 : vector<4x32xf32>
    %cst_60 = arith.constant 1.000000e+00 : f32
    %282 = vector.broadcast %cst_60 : f32 to vector<4x32xf32>
    %283 = arith.addf %282, %281 : vector<4x32xf32>
    %284 = arith.divf %282, %283 : vector<4x32xf32>
    %285 = vector.extract_strided_slice %276 {offsets = [0, 32], sizes = [4, 32], strides = [1, 1]} : vector<4x96xf32> to vector<4x32xf32>
    %286 = vector.extract_strided_slice %226 {offsets = [0, 32], sizes = [4, 32], strides = [1, 1]} : vector<4x96xf32> to vector<4x32xf32>
    %287 = arith.addf %285, %286 : vector<4x32xf32>
    %288 = arith.negf %287 : vector<4x32xf32>
    %289 = math.exp %288 : vector<4x32xf32>
    %cst_61 = arith.constant 1.000000e+00 : f32
    %290 = vector.broadcast %cst_61 : f32 to vector<4x32xf32>
    %291 = arith.addf %290, %289 : vector<4x32xf32>
    %292 = arith.divf %290, %291 : vector<4x32xf32>
    %293 = vector.extract_strided_slice %276 {offsets = [0, 64], sizes = [4, 32], strides = [1, 1]} : vector<4x96xf32> to vector<4x32xf32>
    %294 = vector.extract_strided_slice %226 {offsets = [0, 64], sizes = [4, 32], strides = [1, 1]} : vector<4x96xf32> to vector<4x32xf32>
    %295 = arith.mulf %284, %294 : vector<4x32xf32>
    %296 = arith.addf %293, %295 : vector<4x32xf32>
    %297 = math.tanh %296 : vector<4x32xf32>
    %cst_62 = arith.constant 1.000000e+00 : f32
    %298 = vector.broadcast %cst_62 : f32 to vector<4x32xf32>
    %299 = arith.subf %298, %292 : vector<4x32xf32>
    %300 = arith.mulf %299, %297 : vector<4x32xf32>
    %301 = arith.mulf %292, %220 : vector<4x32xf32>
    %302 = arith.addf %300, %301 : vector<4x32xf32>
    %303 = vector.shape_cast %302 : vector<4x32xf32> to vector<4x1x32xf32>
    %304 = vector.shape_cast %303 : vector<4x1x32xf32> to vector<4x32xf32>
    %c0_63 = arith.constant 0 : index
    %c0_64 = arith.constant 0 : index
    %305 = vector.load %arg10[%c0_63, %c0_64] : memref<4x32xf32, #tpu.memory_space<vmem>>, vector<4x32xf32>
    tpu.vector_store %arg10[%c0_63, %c0_64], %304 {strides = array<i32>} : memref<4x32xf32, #tpu.memory_space<vmem>>, vector<4x32xf32>,
    %306 = vector.shape_cast %100 : vector<4x8xf32> to vector<1x4x8xf32>
    %307 = vector.shape_cast %184 : vector<4x8xf32> to vector<1x4x8xf32>
    %308 = vector.shape_cast %268 : vector<4x8xf32> to vector<1x4x8xf32>
    %309 = tpu.concatenate %306, %307, %308 in 0 : vector<1x4x8xf32>, vector<1x4x8xf32>, vector<1x4x8xf32> -> vector<3x4x8xf32>
    %c0_65 = arith.constant 0 : index
    %c0_66 = arith.constant 0 : index
    %c0_67 = arith.constant 0 : index
    %310 = vector.load %arg11[%c0_65, %c0_66, %c0_67] : memref<3x4x8xf32, #tpu.memory_space<vmem>>, vector<3x4x8xf32>
    tpu.vector_store %arg11[%c0_65, %c0_66, %c0_67], %309 {strides = array<i32>} : memref<3x4x8xf32, #tpu.memory_space<vmem>>, vector<3x4x8xf32>,
    return
  }
  func.func @transform_0(%arg0: i32) -> (i32, i32, i32) {
    %c0_i32 = arith.constant 0 : i32
    %c0_i32_0 = arith.constant 0 : i32
    %c0_i32_1 = arith.constant 0 : i32
    return %arg0, %c0_i32, %c0_i32_0 : i32, i32, i32
  }
  func.func @transform_1(%arg0: i32) -> (i32, i32, i32) {
    %c0_i32 = arith.constant 0 : i32
    %c0_i32_0 = arith.constant 0 : i32
    %c0_i32_1 = arith.constant 0 : i32
    return %arg0, %c0_i32, %c0_i32_0 : i32, i32, i32
  }
  func.func @transform_2(%arg0: i32) -> (i32, i32) {
    %c0_i32 = arith.constant 0 : i32
    %c0_i32_0 = arith.constant 0 : i32
    return %arg0, %c0_i32 : i32, i32
  }
  func.func @transform_3(%arg0: i32) -> (i32, i32) {
    %c0_i32 = arith.constant 0 : i32
    %c0_i32_0 = arith.constant 0 : i32
    %c0_i32_1 = arith.constant 0 : i32
    return %c0_i32, %c0_i32_0 : i32, i32
  }
  func.func @transform_4(%arg0: i32) -> (i32, i32) {
    %c0_i32 = arith.constant 0 : i32
    %c0_i32_0 = arith.constant 0 : i32
    %c0_i32_1 = arith.constant 0 : i32
    return %c0_i32, %c0_i32_0 : i32, i32
  }
  func.func @transform_5(%arg0: i32) -> (i32, i32) {
    %c0_i32 = arith.constant 0 : i32
    %c0_i32_0 = arith.constant 0 : i32
    %c0_i32_1 = arith.constant 0 : i32
    return %c0_i32, %c0_i32_0 : i32, i32
  }
  func.func @transform_6(%arg0: i32) -> (i32, i32) {
    %c0_i32 = arith.constant 0 : i32
    %c0_i32_0 = arith.constant 0 : i32
    %c0_i32_1 = arith.constant 0 : i32
    return %c0_i32, %c0_i32_0 : i32, i32
  }
  func.func @transform_7(%arg0: i32) -> (i32, i32) {
    %c0_i32 = arith.constant 0 : i32
    %c0_i32_0 = arith.constant 0 : i32
    %c0_i32_1 = arith.constant 0 : i32
    return %c0_i32, %c0_i32_0 : i32, i32
  }
  func.func @transform_8(%arg0: i32) -> (i32, i32) {
    %c0_i32 = arith.constant 0 : i32
    %c0_i32_0 = arith.constant 0 : i32
    %c0_i32_1 = arith.constant 0 : i32
    return %c0_i32, %c0_i32_0 : i32, i32
  }
  func.func @transform_9(%arg0: i32) -> (i32, i32) {
    %c0_i32 = arith.constant 0 : i32
    %c0_i32_0 = arith.constant 0 : i32
    return %arg0, %c0_i32 : i32, i32
  }
  func.func @transform_10(%arg0: i32) -> (i32, i32, i32) {
    %c0_i32 = arith.constant 0 : i32
    %c0_i32_0 = arith.constant 0 : i32
    %c0_i32_1 = arith.constant 0 : i32
    return %c0_i32, %arg0, %c0_i32_0 : i32, i32, i32
  }
}

</mosaic_0001>

<llo_original>
// kernel: tpu_custom_call.1
$region0: #{tpu_custom_call.1}
  #allocation0 [shape = 'u32[]', space=smem, size = 0x4, offset = 0x4, fixed_abs, tag = 'smem constant byte address 0x4 - core index']
  #allocation1 [shape = 'u32[144,128]{1,0:T(1,128)}', space=vmem, size = 0x12000, scoped, tag = 'internal scratch']
  %s0 = inlined_call_operand.vmem [shape: f32[4,8,32], index: 0, kind: input, shape index: {}]
  %s1 = inlined_call_operand.vmem [shape: f32[4,1,32], index: 1, kind: input, shape index: {}]
  %s2 = inlined_call_operand.vmem [shape: s32[4,1], index: 2, kind: input, shape index: {}]
  %s3 = inlined_call_operand.vmem [shape: bf16[32,32], index: 3, kind: input, shape index: {}]
  %s4 = inlined_call_operand.vmem [shape: bf16[192,32], index: 4, kind: input, shape index: {}]
  %s5 = inlined_call_operand.vmem [shape: bf16[32,128], index: 5, kind: input, shape index: {}]
  %s6 = inlined_call_operand.vmem [shape: bf16[32,96], index: 6, kind: input, shape index: {}]
  %s7 = inlined_call_operand.vmem [shape: f32[8,32], index: 7, kind: input, shape index: {}]
  %s8 = inlined_call_operand.vmem [shape: f32[8,96], index: 8, kind: input, shape index: {}]
  %s9 = inlined_call_operand.hbm [shape: f32[4,32], index: 9, kind: output, shape index: {0}]
  %s10 = inlined_call_operand.hbm [shape: f32[3,4,8], index: 10, kind: output, shape index: {1}]
  %11 = xla_tuple %s9, %s10
  %s12 = sld [smem:[#allocation0]]
  $region54: #{tpu_custom_call.1} parent=0
    _
  %s14 = ssub.s32 1, %s12
  %s15 = scalar_select 0, %s14, %s12
  $region1: #{tpu_custom_call.1} parent=0
    #allocation2 [shape = 'u8[2048]{0}', space=vmem, size = 0x800, scoped, tag = 'output window, operand 0, single buffered']
    #allocation3 [shape = 's32[1]{0}', space=sflag, size = 0x4, scoped, tag = 'scoped memory for tpu_custom_call.1']
    #allocation4 [shape = 'u8[6144]{0}', space=vmem, size = 0x1800, scoped, tag = 'output window, operand 1, single buffered']
    #allocation5 [shape = 's32[1]{0}', space=sflag, size = 0x4, scoped, tag = 'scoped memory for tpu_custom_call.1']
    %16 = vsyncpa [#allocation3], 0
    %17 = vsyncpa [#allocation5], 0
    // Predicated region
    $region2: #{tpu_custom_call.1} parent=1 // pred_check
      _
    $region3: #{tpu_custom_call.1} parent=1 // pred_check_branch
      %19 = sbr.rel (0) target = $region5
    $region4: #{tpu_custom_call.1} parent=1 // pred_region
      _
    $region5: #{tpu_custom_call.1} parent=1 // pred_fallthru
      _
    // Predicated region
    $region6: #{tpu_custom_call.1} parent=1 // pred_check
      _
    $region7: #{tpu_custom_call.1} parent=1 // pred_check_branch
      %21 = sbr.rel (0) target = $region9
    $region8: #{tpu_custom_call.1} parent=1 // pred_region
      _
    $region9: #{tpu_custom_call.1} parent=1 // pred_fallthru
      _
    // Predicated region
    $region10: #{tpu_custom_call.1} parent=1 // pred_check
      _
    $region11: #{tpu_custom_call.1} parent=1 // pred_check_branch
      %23 = sbr.rel (0) target = $region13
    $region12: #{tpu_custom_call.1} parent=1 // pred_region
      _
    $region13: #{tpu_custom_call.1} parent=1 // pred_fallthru
      _
    // Predicated region
    $region14: #{tpu_custom_call.1} parent=1 // pred_check
      _
    $region15: #{tpu_custom_call.1} parent=1 // pred_check_branch
      %25 = sbr.rel (0) target = $region17
    $region16: #{tpu_custom_call.1} parent=1 // pred_region
      _
    $region17: #{tpu_custom_call.1} parent=1 // pred_fallthru
      _
    // Predicated region
    $region18: #{tpu_custom_call.1} parent=1 // pred_check
      _
    $region19: #{tpu_custom_call.1} parent=1 // pred_check_branch
      %27 = sbr.rel (0) target = $region21
    $region20: #{tpu_custom_call.1} parent=1 // pred_region
      _
    $region21: #{tpu_custom_call.1} parent=1 // pred_fallthru
      _
    // Predicated region
    $region22: #{tpu_custom_call.1} parent=1 // pred_check
      _
    $region23: #{tpu_custom_call.1} parent=1 // pred_check_branch
      %29 = sbr.rel (0) target = $region25
    $region24: #{tpu_custom_call.1} parent=1 // pred_region
      _
    $region25: #{tpu_custom_call.1} parent=1 // pred_fallthru
      _
    // Predicated region
    $region26: #{tpu_custom_call.1} parent=1 // pred_check
      _
    $region27: #{tpu_custom_call.1} parent=1 // pred_check_branch
      %31 = sbr.rel (0) target = $region29
    $region28: #{tpu_custom_call.1} parent=1 // pred_region
      _
    $region29: #{tpu_custom_call.1} parent=1 // pred_fallthru
      _
    // Predicated region
    $region30: #{tpu_custom_call.1} parent=1 // pred_check
      _
    $region31: #{tpu_custom_call.1} parent=1 // pred_check_branch
      %33 = sbr.rel (0) target = $region33
    $region32: #{tpu_custom_call.1} parent=1 // pred_region
      _
    $region33: #{tpu_custom_call.1} parent=1 // pred_fallthru
      _
    // Predicated region
    $region34: #{tpu_custom_call.1} parent=1 // pred_check
      _
    $region35: #{tpu_custom_call.1} parent=1 // pred_check_branch
      %35 = sbr.rel (0) target = $region37
    $region36: #{tpu_custom_call.1} parent=1 // pred_region
      _
    $region37: #{tpu_custom_call.1} parent=1 // pred_fallthru
      _
    %v37 = vld [vmem:[%s0] sm:$0xff]
    %v38 = vld [vmem:[%s0 + $0x8] sm:$0xff]
    %v39 = vld [vmem:[%s0 + $0x10] sm:$0xff]
    %v40 = vld [vmem:[%s0 + $0x18] sm:$0xff]
    %v41 = vld [vmem:[%s1] sm:$0x1]
    %v42 = vld [vmem:[%s1 + $0x1] sm:$0x1]
    %v43 = vld [vmem:[%s1 + $0x2] sm:$0x1]
    %v44 = vld [vmem:[%s1 + $0x3] sm:$0x1]
    %v45 = vld [vmem:[%s2] sm:$0xf]
    %v46 = vld [vmem:[%s3] sm:$0xf]
    %v47 = vld [vmem:[%s3 + $0x4] sm:$0xf]
    %v48 = vld [vmem:[%s3 + $0x8] sm:$0xf]
    %v49 = vld [vmem:[%s3 + $0xc] sm:$0xf]
    %v50 = vld [vmem:[%s4] sm:$0xf]
    %v51 = vld [vmem:[%s4 + $0x4] sm:$0xf]
    %v52 = vld [vmem:[%s4 + $0x8] sm:$0xf]
    %v53 = vld [vmem:[%s4 + $0xc] sm:$0xf]
    %v54 = vld [vmem:[%s4 + $0x10] sm:$0xf]
    %v55 = vld [vmem:[%s4 + $0x14] sm:$0xf]
    %v56 = vld [vmem:[%s4 + $0x18] sm:$0xf]
    %v57 = vld [vmem:[%s4 + $0x1c] sm:$0xf]
    %v58 = vld [vmem:[%s4 + $0x20] sm:$0xf]
    %v59 = vld [vmem:[%s4 + $0x24] sm:$0xf]
    %v60 = vld [vmem:[%s4 + $0x28] sm:$0xf]
    %v61 = vld [vmem:[%s4 + $0x2c] sm:$0xf]
    %v62 = vld [vmem:[%s4 + $0x30] sm:$0xf]
    %v63 = vld [vmem:[%s4 + $0x34] sm:$0xf]
    %v64 = vld [vmem:[%s4 + $0x38] sm:$0xf]
    %v65 = vld [vmem:[%s4 + $0x3c] sm:$0xf]
    %v66 = vld [vmem:[%s4 + $0x40] sm:$0xf]
    %v67 = vld [vmem:[%s4 + $0x44] sm:$0xf]
    %v68 = vld [vmem:[%s4 + $0x48] sm:$0xf]
    %v69 = vld [vmem:[%s4 + $0x4c] sm:$0xf]
    %v70 = vld [vmem:[%s4 + $0x50] sm:$0xf]
    %v71 = vld [vmem:[%s4 + $0x54] sm:$0xf]
    %v72 = vld [vmem:[%s4 + $0x58] sm:$0xf]
    %v73 = vld [vmem:[%s4 + $0x5c] sm:$0xf]
    %v74 = vld [vmem:[%s5] sm:$0xf]
    %v75 = vld [vmem:[%s5 + $0x4] sm:$0xf]
    %v76 = vld [vmem:[%s5 + $0x8] sm:$0xf]
    %v77 = vld [vmem:[%s5 + $0xc] sm:$0xf]
    %v78 = vld [vmem:[%s6] sm:$0xf]
    %v79 = vld [vmem:[%s6 + $0x4] sm:$0xf]
    %v80 = vld [vmem:[%s6 + $0x8] sm:$0xf]
    %v81 = vld [vmem:[%s6 + $0xc] sm:$0xf]
    %v82 = vld [vmem:[%s7] sm:$0xff]
    %v83 = vld [vmem:[%s8] sm:$0xff]
    %v84 = vpack.c.bf16 %v38, %v37
    %v85 = vpack.c.bf16 %v40, %v39
    %v90 = vunpack.c.l.b16 %v46
    %v91 = vunpack.c.l.b16 %v47
    %v92 = vunpack.c.l.b16 %v48
    %v93 = vunpack.c.l.b16 %v49
    %v94 = vpack.c.b16 %v91, %v90
    %v95 = vpack.c.b16 %v93, %v92
    %vm98 = vcmask 261120
    %v100 = vsel %vm98, %v84, 0
    %v103 = vsel %vm98, %v85, 0
    %105 = vmatprep.subr.bf16.mxu0 0
    %106 = vmatpush1.bf16.msra.mxu0 %v94
    %107 = vmatprep.subr.bf16.mxu0 0
    %108 = vmatpush1.bf16.msra.mxu0 %v95
    %109 = vmatprep.subr.bf16.mxu0 0
    %110 = vmatpush1.bf16.msra.mxu0 0
    %111 = vmatprep.subr.bf16.mxu0 0
    %112 = vmatpush1.bf16.msra.mxu0 0
    %113 = vmatprep.subr.bf16.mxu0 0
    %114 = vmatpush1.bf16.msra.mxu0 0
    %115 = vmatprep.subr.bf16.mxu0 0
    %116 = vmatpush1.bf16.msra.mxu0 0
    %117 = vmatprep.subr.bf16.mxu0 0
    %118 = vmatpush1.bf16.msra.mxu0 0
    %119 = vmatprep.subr.bf16.mxu0 0
    %120 = vmatpush1.bf16.msra.mxu0 0
    %121 = vmatprep.subr.bf16.mxu0 0
    %122 = vmatpush1.bf16.msra.mxu0 0
    %123 = vmatprep.subr.bf16.mxu0 0
    %124 = vmatpush1.bf16.msra.mxu0 0
    %125 = vmatprep.subr.bf16.mxu0 0
    %126 = vmatpush1.bf16.msra.mxu0 0
    %127 = vmatprep.subr.bf16.mxu0 0
    %128 = vmatpush1.bf16.msra.mxu0 0
    %129 = vmatprep.subr.bf16.mxu0 0
    %130 = vmatpush1.bf16.msra.mxu0 0
    %131 = vmatprep.subr.bf16.mxu0 0
    %132 = vmatpush1.bf16.msra.mxu0 0
    %133 = vmatprep.subr.bf16.mxu0 0
    %134 = vmatpush1.bf16.msra.mxu0 0
    %135 = vmatprep.subr.bf16.mxu0 0
    %136 = vmatpush1.bf16.msra.mxu0 0
    %137 = vmatprep.mubr.bf16.mxu0 0
    %138 = vmatmul.mubr.bf16.gmra.mrb[0].mxu0 %v100
    %v139 = vpop.f32.mrb[0].mxu0
    %v140 = vadd.f32 0.0, %v139
    %v141 = vpop.f32.mrb[0].mxu0
    %v142 = vpop.f32.mrb[0].mxu0
    %v143 = vadd.f32 0.0, %v142
    %v144 = vpop.f32.mrb[0].mxu0
    %145 = vmatprep.mubr.bf16.mxu0 0
    %146 = vmatmul.mubr.bf16.gmra.mrb[0].mxu0 %v103
    %v147 = vpop.f32.mrb[0].mxu0
    %v148 = vadd.f32 0.0, %v147
    %v149 = vpop.f32.mrb[0].mxu0
    %v150 = vpop.f32.mrb[0].mxu0
    %v151 = vadd.f32 0.0, %v150
    %v152 = vpop.f32.mrb[0].mxu0
    %153 = vdwg.mxu0
    %v158 = vlaneseq
    %v159 = vshrl.u32 %v158, 7
    %v160 = vsub.s32 0, %v159
    %v161 = vrot.slane %v41, %v160
    %v162 = vlaneseq
    %v163 = vshrl.u32 %v162, 7
    %v164 = vsub.s32 0, %v163
    %v165 = vrot.slane %v42, %v164
    %v166 = vlaneseq
    %v167 = vshrl.u32 %v166, 7
    %v168 = vsub.s32 0, %v167
    %v169 = vrot.slane %v43, %v168
    %v170 = vlaneseq
    %v171 = vshrl.u32 %v170, 7
    %v172 = vsub.s32 0, %v171
    %v173 = vrot.slane %v44, %v172
    %v178 = vmul.f32 %v140, %v161
    %v179 = vmul.f32 %v143, %v165
    %v180 = vmul.f32 %v148, %v169
    %v181 = vmul.f32 %v151, %v173
    %v182 = vsel %vm98, %v178, 0.0
    %183 = vadd.xlane.f32.xlu0 %v182
    %v184 = vpop.xlane.xlu0 %183
    %v185 = vsel %vm98, %v179, 0.0
    %186 = vadd.xlane.f32.xlu0 %v185
    %v187 = vpop.xlane.xlu0 %186
    %v188 = vsel %vm98, %v180, 0.0
    %189 = vadd.xlane.f32.xlu0 %v188
    %v190 = vpop.xlane.xlu0 %189
    %v191 = vsel %vm98, %v181, 0.0
    %192 = vadd.xlane.f32.xlu0 %v191
    %v193 = vpop.xlane.xlu0 %192
    %v194 = vmul.f32 %v37, %v161
    %v195 = vmul.f32 %v38, %v165
    %v196 = vmul.f32 %v39, %v169
    %v197 = vmul.f32 %v40, %v173
    %v198 = vsub.f32 %v37, %v161
    %v199 = vsub.f32 %v38, %v165
    %v200 = vsub.f32 %v39, %v169
    %v201 = vsub.f32 %v40, %v173
    %v202 = vand.u32 2147483647, %v198
    %v203 = vand.u32 2147483647, %v199
    %v204 = vand.u32 2147483647, %v200
    %v205 = vand.u32 2147483647, %v201
    %210 = vrot.lane.b32.xlu0 %v194, 32
    %v211 = vpop.permute.xlu0 %210
    %212 = vrot.lane.b32.xlu0 %v195, 32
    %v213 = vpop.permute.xlu0 %212
    %214 = vrot.lane.b32.xlu0 %v196, 32
    %v215 = vpop.permute.xlu0 %214
    %216 = vrot.lane.b32.xlu0 %v197, 32
    %v217 = vpop.permute.xlu0 %216
    %226 = vrot.lane.b32.xlu0 %v202, 64
    %v227 = vpop.permute.xlu0 %226
    %228 = vrot.lane.b32.xlu0 %v203, 64
    %v229 = vpop.permute.xlu0 %228
    %230 = vrot.lane.b32.xlu0 %v204, 64
    %v231 = vpop.permute.xlu0 %230
    %232 = vrot.lane.b32.xlu0 %v205, 64
    %v233 = vpop.permute.xlu0 %232
    %v238 = vsel %vm98, %v37, %v211
    %v239 = vsel %vm98, %v38, %v213
    %v240 = vsel %vm98, %v39, %v215
    %v241 = vsel %vm98, %v40, %v217
    %vm242 = vcmask 523264
    %v243 = vsel %vm242, %v238, %v227
    %v244 = vsel %vm242, %v239, %v229
    %v245 = vsel %vm242, %v240, %v231
    %v246 = vsel %vm242, %v241, %v233
    %v247 = vpack.c.bf16 %v244, %v243
    %v248 = vpack.c.bf16 %v246, %v245
    %v261 = vunpack.c.l.b16 %v50
    %v262 = vunpack.c.l.b16 %v51
    %v263 = vunpack.c.l.b16 %v52
    %v264 = vunpack.c.l.b16 %v53
    %v265 = vunpack.c.l.b16 %v54
    %v266 = vunpack.c.l.b16 %v55
    %v267 = vunpack.c.l.b16 %v56
    %v268 = vunpack.c.l.b16 %v57
    %v269 = vunpack.c.l.b16 %v58
    %v270 = vunpack.c.l.b16 %v59
    %v271 = vunpack.c.l.b16 %v60
    %v272 = vunpack.c.l.b16 %v61
    %v273 = vpack.c.b16 %v262, %v261
    %v274 = vpack.c.b16 %v264, %v263
    %v275 = vpack.c.b16 %v266, %v265
    %v276 = vpack.c.b16 %v268, %v267
    %v277 = vpack.c.b16 %v270, %v269
    %v278 = vpack.c.b16 %v272, %v271
    %vm285 = vcmask 785408
    %v287 = vsel %vm285, %v247, 0
    %v290 = vsel %vm285, %v248, 0
    %292 = vmatprep.subr.bf16.mxu0 0
    %293 = vmatpush1.bf16.msra.mxu0 %v273
    %294 = vmatprep.subr.bf16.mxu0 0
    %295 = vmatpush1.bf16.msra.mxu0 %v274
    %296 = vmatprep.subr.bf16.mxu0 0
    %297 = vmatpush1.bf16.msra.mxu0 %v275
    %298 = vmatprep.subr.bf16.mxu0 0
    %299 = vmatpush1.bf16.msra.mxu0 %v276
    %300 = vmatprep.subr.bf16.mxu0 0
    %301 = vmatpush1.bf16.msra.mxu0 %v277
    %302 = vmatprep.subr.bf16.mxu0 0
    %303 = vmatpush1.bf16.msra.mxu0 %v278
    %304 = vmatprep.subr.bf16.mxu0 0
    %305 = vmatpush1.bf16.msra.mxu0 0
    %306 = vmatprep.subr.bf16.mxu0 0
    %307 = vmatpush1.bf16.msra.mxu0 0
    %308 = vmatprep.subr.bf16.mxu0 0
    %309 = vmatpush1.bf16.msra.mxu0 0
    %310 = vmatprep.subr.bf16.mxu0 0
    %311 = vmatpush1.bf16.msra.mxu0 0
    %312 = vmatprep.subr.bf16.mxu0 0
    %313 = vmatpush1.bf16.msra.mxu0 0
    %314 = vmatprep.subr.bf16.mxu0 0
    %315 = vmatpush1.bf16.msra.mxu0 0
    %316 = vmatprep.subr.bf16.mxu0 0
    %317 = vmatpush1.bf16.msra.mxu0 0
    %318 = vmatprep.subr.bf16.mxu0 0
    %319 = vmatpush1.bf16.msra.mxu0 0
    %320 = vmatprep.subr.bf16.mxu0 0
    %321 = vmatpush1.bf16.msra.mxu0 0
    %322 = vmatprep.subr.bf16.mxu0 0
    %323 = vmatpush1.bf16.msra.mxu0 0
    %324 = vmatprep.mubr.bf16.mxu0 0
    %325 = vmatmul.mubr.bf16.gmra.mrb[0].mxu0 %v287
    %v326 = vpop.f32.mrb[0].mxu0
    %v327 = vadd.f32 0.0, %v326
    %v328 = vpop.f32.mrb[0].mxu0
    %v329 = vpop.f32.mrb[0].mxu0
    %v330 = vadd.f32 0.0, %v329
    %v331 = vpop.f32.mrb[0].mxu0
    %332 = vmatprep.mubr.bf16.mxu0 0
    %333 = vmatmul.mubr.bf16.gmra.mrb[0].mxu0 %v290
    %v334 = vpop.f32.mrb[0].mxu0
    %v335 = vadd.f32 0.0, %v334
    %v336 = vpop.f32.mrb[0].mxu0
    %v337 = vpop.f32.mrb[0].mxu0
    %v338 = vadd.f32 0.0, %v337
    %v339 = vpop.f32.mrb[0].mxu0
    %340 = vdwg.mxu0
    %v341 = vpack.c.bf16 %v41, %v41
    %v342 = vpack.c.bf16 %v42, %v42
    %v343 = vpack.c.bf16 %v43, %v43
    %v344 = vpack.c.bf16 %v44, %v44
    %v349 = vunpack.c.l.b16 %v341
    %v350 = vunpack.c.l.b16 %v342
    %v351 = vunpack.c.l.b16 %v343
    %v352 = vunpack.c.l.b16 %v344
    %v353 = vrot.slane %v350, 7
    %vm354 = vcmask 1041409
    %v355 = vsel %vm354, %v353, %v349
    %v356 = vrot.slane %v351, 6
    %vm357 = vcmask 1042434
    %v358 = vsel %vm357, %v356, %v355
    %v359 = vrot.slane %v352, 5
    %vm360 = vcmask 1043459
    %v361 = vsel %vm360, %v359, %v358
    %v362 = vpack.c.b16 %v361, %v361
    %v367 = vunpack.c.l.b16 %v62
    %v368 = vunpack.c.l.b16 %v63
    %v369 = vunpack.c.l.b16 %v64
    %v370 = vunpack.c.l.b16 %v65
    %v371 = vpack.c.b16 %v368, %v367
    %v372 = vpack.c.b16 %v370, %v369
    %v376 = vsel %vm98, %v362, 0
    %378 = vmatprep.subr.bf16.mxu0 0
    %379 = vmatpush1.bf16.msra.mxu0 %v371
    %380 = vmatprep.subr.bf16.mxu0 0
    %381 = vmatpush1.bf16.msra.mxu0 %v372
    %382 = vmatprep.subr.bf16.mxu0 0
    %383 = vmatpush1.bf16.msra.mxu0 0
    %384 = vmatprep.subr.bf16.mxu0 0
    %385 = vmatpush1.bf16.msra.mxu0 0
    %386 = vmatprep.subr.bf16.mxu0 0
    %387 = vmatpush1.bf16.msra.mxu0 0
    %388 = vmatprep.subr.bf16.mxu0 0
    %389 = vmatpush1.bf16.msra.mxu0 0
    %390 = vmatprep.subr.bf16.mxu0 0
    %391 = vmatpush1.bf16.msra.mxu0 0
    %392 = vmatprep.subr.bf16.mxu0 0
    %393 = vmatpush1.bf16.msra.mxu0 0
    %394 = vmatprep.subr.bf16.mxu0 0
    %395 = vmatpush1.bf16.msra.mxu0 0
    %396 = vmatprep.subr.bf16.mxu0 0
    %397 = vmatpush1.bf16.msra.mxu0 0
    %398 = vmatprep.subr.bf16.mxu0 0
    %399 = vmatpush1.bf16.msra.mxu0 0
    %400 = vmatprep.subr.bf16.mxu0 0
    %401 = vmatpush1.bf16.msra.mxu0 0
    %402 = vmatprep.subr.bf16.mxu0 0
    %403 = vmatpush1.bf16.msra.mxu0 0
    %404 = vmatprep.subr.bf16.mxu0 0
    %405 = vmatpush1.bf16.msra.mxu0 0
    %406 = vmatprep.subr.bf16.mxu0 0
    %407 = vmatpush1.bf16.msra.mxu0 0
    %408 = vmatprep.subr.bf16.mxu0 0
    %409 = vmatpush1.bf16.msra.mxu0 0
    %410 = vmatprep.mubr.bf16.mxu0 0
    %411 = vmatmul.mubr.bf16.gmra.mrb[0].mxu0 %v376
    %v412 = vpop.f32.mrb[0].mxu0
    %v413 = vadd.f32 0.0, %v412
    %v414 = vpop.f32.mrb[0].mxu0
    %v415 = vpop.f32.mrb[0].mxu0
    %v416 = vpop.f32.mrb[0].mxu0
    %417 = vdwg.mxu0
    %v420 = vunpack.c.l.s4 1966171168
    %v421 = vunpack.c.0.s8 %v420
    %v422 = vlaneseq
    %v423 = vshrl.u32 %v422, 7
    %v424 = vsub.s32 %v421, %v423
    %v425 = vrot.slane %v413, %v424
    %v426 = vcombine.high %v425, %v425
    %v428 = vunpack.c.l.s4 1966171168
    %v429 = vunpack.c.0.s8 %v428
    %v430 = vlaneseq
    %v431 = vshrl.u32 %v430, 7
    %v432 = vsub.s32 %v429, %v431
    %v433 = vrot.slane %v425, %v432
    %v435 = vunpack.c.l.s4 1966171168
    %v436 = vunpack.c.0.s8 %v435
    %v437 = vlaneseq
    %v438 = vshrl.u32 %v437, 7
    %v439 = vsub.s32 %v436, %v438
    %v440 = vrot.slane %v426, %v439
    %v441 = vcombine.high %v433, %v433
    %v442 = vcombine.high %v440, %v440
    %v443 = vlaneseq
    %v444 = vshrl.u32 %v443, 7
    %v445 = vsub.s32 0, %v444
    %v446 = vrot.slane %v433, %v445
    %v447 = vlaneseq
    %v448 = vshrl.u32 %v447, 7
    %v449 = vsub.s32 0, %v448
    %v450 = vrot.slane %v440, %v449
    %v451 = vlaneseq
    %v452 = vshrl.u32 %v451, 7
    %v453 = vsub.s32 0, %v452
    %v454 = vrot.slane %v441, %v453
    %v455 = vlaneseq
    %v456 = vshrl.u32 %v455, 7
    %v457 = vsub.s32 0, %v456
    %v458 = vrot.slane %v442, %v457
    %v463 = vadd.f32 %v327, %v446
    %v464 = vadd.f32 %v330, %v450
    %v465 = vadd.f32 %v335, %v454
    %v466 = vadd.f32 %v338, %v458
    %v467 = vlaneseq
    %v468 = vshrl.u32 %v467, 7
    %v469 = vsub.s32 0, %v468
    %v470 = vrot.slane %v82, %v469
    %v471 = vmul.f32 %v184, %v470
    %v472 = vmul.f32 %v187, %v470
    %v473 = vmul.f32 %v190, %v470
    %v474 = vmul.f32 %v193, %v470
    %v475 = vadd.f32 %v463, %v471
    %v476 = vadd.f32 %v464, %v472
    %v477 = vadd.f32 %v465, %v473
    %v478 = vadd.f32 %v466, %v474
    %v479 = vlaneseq
    %v480 = vshrl.u32 %v479, 7
    %v481 = vsub.s32 2, %v480
    %v482 = vrot.slane %v82, %v481
    %v483 = vadd.f32 %v475, %v482
    %v484 = vadd.f32 %v476, %v482
    %v485 = vadd.f32 %v477, %v482
    %v486 = vadd.f32 %v478, %v482
    %v487 = vlaneseq
    %v488 = vand.u32 %v487, 127
    %489 = vset.pattern.permute.xlu0 0
    %490 = vperm.xlu0 %489, %v45
    %v491 = vpop.permute.xlu0 %490
    %vm492 = vcmp.lt.s32.totalorder %v488, %v491
    %v497 = vunpack.c.l.b16 %v74
    %v498 = vunpack.c.l.b16 %v75
    %v499 = vunpack.c.l.b16 %v76
    %v500 = vunpack.c.l.b16 %v77
    %v501 = vpack.c.b16 %v498, %v497
    %v502 = vpack.c.b16 %v500, %v499
    %505 = vmatprep.subr.bf16.mxu0 0
    %506 = vmatpush1.bf16.msra.mxu0 %v501
    %507 = vmatprep.subr.bf16.mxu0 0
    %508 = vmatpush1.bf16.msra.mxu0 %v502
    %509 = vmatprep.subr.bf16.mxu0 0
    %510 = vmatpush1.bf16.msra.mxu0 0
    %511 = vmatprep.subr.bf16.mxu0 0
    %512 = vmatpush1.bf16.msra.mxu0 0
    %513 = vmatprep.subr.bf16.mxu0 0
    %514 = vmatpush1.bf16.msra.mxu0 0
    %515 = vmatprep.subr.bf16.mxu0 0
    %516 = vmatpush1.bf16.msra.mxu0 0
    %517 = vmatprep.subr.bf16.mxu0 0
    %518 = vmatpush1.bf16.msra.mxu0 0
    %519 = vmatprep.subr.bf16.mxu0 0
    %520 = vmatpush1.bf16.msra.mxu0 0
    %521 = vmatprep.subr.bf16.mxu0 0
    %522 = vmatpush1.bf16.msra.mxu0 0
    %523 = vmatprep.subr.bf16.mxu0 0
    %524 = vmatpush1.bf16.msra.mxu0 0
    %525 = vmatprep.subr.bf16.mxu0 0
    %526 = vmatpush1.bf16.msra.mxu0 0
    %527 = vmatprep.subr.bf16.mxu0 0
    %528 = vmatpush1.bf16.msra.mxu0 0
    %529 = vmatprep.subr.bf16.mxu0 0
    %530 = vmatpush1.bf16.msra.mxu0 0
    %531 = vmatprep.subr.bf16.mxu0 0
    %532 = vmatpush1.bf16.msra.mxu0 0
    %533 = vmatprep.subr.bf16.mxu0 0
    %534 = vmatpush1.bf16.msra.mxu0 0
    %535 = vmatprep.subr.bf16.mxu0 0
    %536 = vmatpush1.bf16.msra.mxu0 0
    %537 = vmatprep.mubr.bf16.mxu0 0
    %538 = vmatmul.mubr.bf16.gmra.mrb[0].mxu0 %v376
    %v539 = vpop.f32.mrb[0].mxu0
    %v540 = vadd.f32 0.0, %v539
    %v541 = vpop.f32.mrb[0].mxu0
    %v542 = vpop.f32.mrb[0].mxu0
    %v543 = vpop.f32.mrb[0].mxu0
    %544 = vdwg.mxu0
    %v545 = vlaneseq
    %v546 = vshrl.u32 %v545, 7
    %v547 = vsub.s32 1, %v546
    %v548 = vrot.slane %v83, %v547
    %550 = vrot.lane.b32.xlu0 %v548, 32
    %v551 = vpop.permute.xlu0 %550
    %v553 = vadd.f32 %v540, %v551
    %554 = vrot.lane.b32.xlu0 %v202, 32
    %v555 = vpop.permute.xlu0 %554
    %556 = vrot.lane.b32.xlu0 %v203, 32
    %v557 = vpop.permute.xlu0 %556
    %558 = vrot.lane.b32.xlu0 %v204, 32
    %v559 = vpop.permute.xlu0 %558
    %560 = vrot.lane.b32.xlu0 %v205, 32
    %v561 = vpop.permute.xlu0 %560
    %v566 = vsel %vm98, %v194, %v555
    %v567 = vsel %vm98, %v195, %v557
    %v568 = vsel %vm98, %v196, %v559
    %v569 = vsel %vm98, %v197, %v561
    %v572 = vunpack.c.l.s4 1966171168
    %v573 = vunpack.c.0.s8 %v572
    %v574 = vlaneseq
    %v575 = vshrl.u32 %v574, 7
    %v576 = vsub.s32 %v573, %v575
    %v577 = vrot.slane %v540, %v576
    %v578 = vcombine.high %v577, %v577
    %v580 = vunpack.c.l.s4 1966171168
    %v581 = vunpack.c.0.s8 %v580
    %v582 = vlaneseq
    %v583 = vshrl.u32 %v582, 7
    %v584 = vsub.s32 %v581, %v583
    %v585 = vrot.slane %v577, %v584
    %v587 = vunpack.c.l.s4 1966171168
    %v588 = vunpack.c.0.s8 %v587
    %v589 = vlaneseq
    %v590 = vshrl.u32 %v589, 7
    %v591 = vsub.s32 %v588, %v590
    %v592 = vrot.slane %v578, %v591
    %v593 = vcombine.high %v585, %v585
    %v594 = vcombine.high %v592, %v592
    %v595 = vlaneseq
    %v596 = vshrl.u32 %v595, 7
    %v597 = vsub.s32 0, %v596
    %v598 = vrot.slane %v585, %v597
    %v599 = vlaneseq
    %v600 = vshrl.u32 %v599, 7
    %v601 = vsub.s32 0, %v600
    %v602 = vrot.slane %v592, %v601
    %v603 = vlaneseq
    %v604 = vshrl.u32 %v603, 7
    %v605 = vsub.s32 0, %v604
    %v606 = vrot.slane %v593, %v605
    %v607 = vlaneseq
    %v608 = vshrl.u32 %v607, 7
    %v609 = vsub.s32 0, %v608
    %v610 = vrot.slane %v594, %v609
    %v615 = vadd.f32 %v483, %v598
    %v616 = vadd.f32 %v484, %v602
    %v617 = vadd.f32 %v485, %v606
    %v618 = vadd.f32 %v486, %v610
    %v619 = vlaneseq
    %v620 = vshrl.u32 %v619, 7
    %v621 = vsub.s32 1, %v620
    %v622 = vrot.slane %v82, %v621
    %v623 = vmul.f32 %v184, %v622
    %v624 = vmul.f32 %v187, %v622
    %v625 = vmul.f32 %v190, %v622
    %v626 = vmul.f32 %v193, %v622
    %v627 = vadd.f32 %v615, %v623
    %v628 = vadd.f32 %v616, %v624
    %v629 = vadd.f32 %v617, %v625
    %v630 = vadd.f32 %v618, %v626
    %v631 = vpack.c.bf16 %v567, %v566
    %v632 = vpack.c.bf16 %v569, %v568
    %v641 = vunpack.c.l.b16 %v66
    %v642 = vunpack.c.l.b16 %v67
    %v643 = vunpack.c.l.b16 %v68
    %v644 = vunpack.c.l.b16 %v69
    %v645 = vunpack.c.l.b16 %v70
    %v646 = vunpack.c.l.b16 %v71
    %v647 = vunpack.c.l.b16 %v72
    %v648 = vunpack.c.l.b16 %v73
    %v649 = vpack.c.b16 %v642, %v641
    %v650 = vpack.c.b16 %v644, %v643
    %v651 = vpack.c.b16 %v646, %v645
    %v652 = vpack.c.b16 %v648, %v647
    %v658 = vsel %vm242, %v631, 0
    %v661 = vsel %vm242, %v632, 0
    %663 = vmatprep.subr.bf16.mxu0 0
    %664 = vmatpush1.bf16.msra.mxu0 %v649
    %665 = vmatprep.subr.bf16.mxu0 0
    %666 = vmatpush1.bf16.msra.mxu0 %v650
    %667 = vmatprep.subr.bf16.mxu0 0
    %668 = vmatpush1.bf16.msra.mxu0 %v651
    %669 = vmatprep.subr.bf16.mxu0 0
    %670 = vmatpush1.bf16.msra.mxu0 %v652
    %671 = vmatprep.subr.bf16.mxu0 0
    %672 = vmatpush1.bf16.msra.mxu0 0
    %673 = vmatprep.subr.bf16.mxu0 0
    %674 = vmatpush1.bf16.msra.mxu0 0
    %675 = vmatprep.subr.bf16.mxu0 0
    %676 = vmatpush1.bf16.msra.mxu0 0
    %677 = vmatprep.subr.bf16.mxu0 0
    %678 = vmatpush1.bf16.msra.mxu0 0
    %679 = vmatprep.subr.bf16.mxu0 0
    %680 = vmatpush1.bf16.msra.mxu0 0
    %681 = vmatprep.subr.bf16.mxu0 0
    %682 = vmatpush1.bf16.msra.mxu0 0
    %683 = vmatprep.subr.bf16.mxu0 0
    %684 = vmatpush1.bf16.msra.mxu0 0
    %685 = vmatprep.subr.bf16.mxu0 0
    %686 = vmatpush1.bf16.msra.mxu0 0
    %687 = vmatprep.subr.bf16.mxu0 0
    %688 = vmatpush1.bf16.msra.mxu0 0
    %689 = vmatprep.subr.bf16.mxu0 0
    %690 = vmatpush1.bf16.msra.mxu0 0
    %691 = vmatprep.subr.bf16.mxu0 0
    %692 = vmatpush1.bf16.msra.mxu0 0
    %693 = vmatprep.subr.bf16.mxu0 0
    %694 = vmatpush1.bf16.msra.mxu0 0
    %695 = vmatprep.mubr.bf16.mxu0 0
    %696 = vmatmul.mubr.bf16.gmra.mrb[0].mxu0 %v658
    %v697 = vpop.f32.mrb[0].mxu0
    %v698 = vadd.f32 0.0, %v697
    %v699 = vpop.f32.mrb[0].mxu0
    %v700 = vpop.f32.mrb[0].mxu0
    %v701 = vadd.f32 0.0, %v700
    %v702 = vpop.f32.mrb[0].mxu0
    %703 = vmatprep.mubr.bf16.mxu0 0
    %704 = vmatmul.mubr.bf16.gmra.mrb[0].mxu0 %v661
    %v705 = vpop.f32.mrb[0].mxu0
    %v706 = vadd.f32 0.0, %v705
    %v707 = vpop.f32.mrb[0].mxu0
    %v708 = vpop.f32.mrb[0].mxu0
    %v709 = vadd.f32 0.0, %v708
    %v710 = vpop.f32.mrb[0].mxu0
    %711 = vdwg.mxu0
    %v712 = vadd.f32 %v627, %v698
    %v713 = vadd.f32 %v628, %v701
    %v714 = vadd.f32 %v629, %v706
    %v715 = vadd.f32 %v630, %v709
    %v716 = vtanh.pop %v712
    %v717 = vtanh.pop %v713
    %v718 = vtanh.pop %v714
    %v719 = vtanh.pop %v715
    %v720 = vlaneseq
    %v721 = vshrl.u32 %v720, 7
    %v722 = vsub.s32 3, %v721
    %v723 = vrot.slane %v82, %v722
    %v724 = vmul.f32 %v716, %v723
    %v725 = vmul.f32 %v717, %v723
    %v726 = vmul.f32 %v718, %v723
    %v727 = vmul.f32 %v719, %v723
    %v728 = vsel %vm98, %v724, 0.0
    %729 = vadd.xlane.f32.xlu0 %v728
    %v730 = vpop.xlane.xlu0 %729
    %v731 = vsel %vm98, %v725, 0.0
    %732 = vadd.xlane.f32.xlu0 %v731
    %v733 = vpop.xlane.xlu0 %732
    %v734 = vsel %vm98, %v726, 0.0
    %735 = vadd.xlane.f32.xlu0 %v734
    %v736 = vpop.xlane.xlu0 %735
    %v737 = vsel %vm98, %v727, 0.0
    %738 = vadd.xlane.f32.xlu0 %v737
    %v739 = vpop.xlane.xlu0 %738
    %v744 = vlaneseq
    %v745 = vshrl.u32 %v744, 7
    %v746 = vsub.s32 %v488, %v745
    %v747 = vrot.slane %v730, %v746
    %v748 = vlaneseq
    %v749 = vshrl.u32 %v748, 7
    %v750 = vsub.s32 %v488, %v749
    %v751 = vrot.slane %v733, %v750
    %v752 = vlaneseq
    %v753 = vshrl.u32 %v752, 7
    %v754 = vsub.s32 %v488, %v753
    %v755 = vrot.slane %v736, %v754
    %v756 = vlaneseq
    %v757 = vshrl.u32 %v756, 7
    %v758 = vsub.s32 %v488, %v757
    %v759 = vrot.slane %v739, %v758
    %v760 = vsel %vm354, %v751, %v747
    %v761 = vsel %vm357, %v755, %v760
    %v762 = vsel %vm360, %v759, %v761
    %v764 = vsel %vm492, %v762, -inf
    %vm765 = vcmask 60416
    %v766 = vsel %vm765, %v764, -inf
    %767 = vmax.xlane.f32.xlu0 %v766
    %v768 = vpop.xlane.xlu0 %767
    %v769 = vsub.f32 %v764, %v768
    %v770 = vmul.f32 %v769, 1.442695
    %v771 = vpow.pop %v770
    %v772 = vsel %vm492, %v771, 0.0
    %v773 = vsel %vm765, %v772, 0.0
    %774 = vadd.xlane.f32.xlu0 %v773
    %v775 = vpop.xlane.xlu0 %774
    %v776 = vrcp.pop %v775
    %v777 = vmul.f32 %v772, %v776
    %v778 = vlaneseq
    %v779 = vshrl.u32 %v778, 7
    %v780 = vsub.s32 0, %v779
    %v781 = vrot.slane %v777, %v780
    %783 = vbcast.lane.b32.xlu0 %v781, 256
    %v784 = vpop.permute.xlu0 %783
    %v785 = vlaneseq
    %v786 = vshrl.u32 %v785, 7
    %v787 = vsub.s32 1, %v786
    %v788 = vrot.slane %v777, %v787
    %790 = vbcast.lane.b32.xlu0 %v788, 256
    %v791 = vpop.permute.xlu0 %790
    %v792 = vlaneseq
    %v793 = vshrl.u32 %v792, 7
    %v794 = vsub.s32 2, %v793
    %v795 = vrot.slane %v777, %v794
    %797 = vbcast.lane.b32.xlu0 %v795, 256
    %v798 = vpop.permute.xlu0 %797
    %v799 = vlaneseq
    %v800 = vshrl.u32 %v799, 7
    %v801 = vsub.s32 3, %v800
    %v802 = vrot.slane %v777, %v801
    %804 = vbcast.lane.b32.xlu0 %v802, 256
    %v805 = vpop.permute.xlu0 %804
    %v806 = vmul.f32 %v37, %v784
    %v807 = vmul.f32 %v38, %v791
    %v808 = vmul.f32 %v39, %v798
    %v809 = vmul.f32 %v40, %v805
    %v810 = vsel %vm98, %v806, 0.0
    %v811 = vrot.slane %v810, 4
    %v812 = vadd.f32 %v810, %v811
    %v813 = vrot.slane %v812, 2
    %v814 = vadd.f32 %v812, %v813
    %v815 = vrot.slane %v814, 1
    %v816 = vadd.f32 %v814, %v815
    %v817 = vsel %vm98, %v807, 0.0
    %v818 = vrot.slane %v817, 4
    %v819 = vadd.f32 %v817, %v818
    %v820 = vrot.slane %v819, 2
    %v821 = vadd.f32 %v819, %v820
    %v822 = vrot.slane %v821, 1
    %v823 = vadd.f32 %v821, %v822
    %v824 = vsel %vm98, %v808, 0.0
    %v825 = vrot.slane %v824, 4
    %v826 = vadd.f32 %v824, %v825
    %v827 = vrot.slane %v826, 2
    %v828 = vadd.f32 %v826, %v827
    %v829 = vrot.slane %v828, 1
    %v830 = vadd.f32 %v828, %v829
    %v831 = vsel %vm98, %v809, 0.0
    %v832 = vrot.slane %v831, 4
    %v833 = vadd.f32 %v831, %v832
    %v834 = vrot.slane %v833, 2
    %v835 = vadd.f32 %v833, %v834
    %v836 = vrot.slane %v835, 1
    %v837 = vadd.f32 %v835, %v836
    %v838 = vpack.c.bf16 %v816, %v816
    %v839 = vpack.c.bf16 %v823, %v823
    %v840 = vpack.c.bf16 %v830, %v830
    %v841 = vpack.c.bf16 %v837, %v837
    %v842 = vlaneseq
    %v843 = vshrl.u32 %v842, 7
    %v844 = vsub.s32 0, %v843
    %v845 = vrot.slane %v83, %v844
    %v850 = vunpack.c.l.b16 %v838
    %v851 = vunpack.c.l.b16 %v839
    %v852 = vunpack.c.l.b16 %v840
    %v853 = vunpack.c.l.b16 %v841
    %v854 = vsel %vm354, %v851, %v850
    %v855 = vsel %vm357, %v852, %v854
    %v856 = vsel %vm360, %v853, %v855
    %v857 = vpack.c.b16 %v856, %v856
    %v862 = vunpack.c.l.b16 %v78
    %v863 = vunpack.c.l.b16 %v79
    %v864 = vunpack.c.l.b16 %v80
    %v865 = vunpack.c.l.b16 %v81
    %v866 = vpack.c.b16 %v863, %v862
    %v867 = vpack.c.b16 %v865, %v864
    %v871 = vsel %vm98, %v857, 0
    %873 = vmatprep.subr.bf16.mxu0 0
    %874 = vmatpush1.bf16.msra.mxu0 %v866
    %875 = vmatprep.subr.bf16.mxu0 0
    %876 = vmatpush1.bf16.msra.mxu0 %v867
    %877 = vmatprep.subr.bf16.mxu0 0
    %878 = vmatpush1.bf16.msra.mxu0 0
    %879 = vmatprep.subr.bf16.mxu0 0
    %880 = vmatpush1.bf16.msra.mxu0 0
    %881 = vmatprep.subr.bf16.mxu0 0
    %882 = vmatpush1.bf16.msra.mxu0 0
    %883 = vmatprep.subr.bf16.mxu0 0
    %884 = vmatpush1.bf16.msra.mxu0 0
    %885 = vmatprep.subr.bf16.mxu0 0
    %886 = vmatpush1.bf16.msra.mxu0 0
    %887 = vmatprep.subr.bf16.mxu0 0
    %888 = vmatpush1.bf16.msra.mxu0 0
    %889 = vmatprep.subr.bf16.mxu0 0
    %890 = vmatpush1.bf16.msra.mxu0 0
    %891 = vmatprep.subr.bf16.mxu0 0
    %892 = vmatpush1.bf16.msra.mxu0 0
    %893 = vmatprep.subr.bf16.mxu0 0
    %894 = vmatpush1.bf16.msra.mxu0 0
    %895 = vmatprep.subr.bf16.mxu0 0
    %896 = vmatpush1.bf16.msra.mxu0 0
    %897 = vmatprep.subr.bf16.mxu0 0
    %898 = vmatpush1.bf16.msra.mxu0 0
    %899 = vmatprep.subr.bf16.mxu0 0
    %900 = vmatpush1.bf16.msra.mxu0 0
    %901 = vmatprep.subr.bf16.mxu0 0
    %902 = vmatpush1.bf16.msra.mxu0 0
    %903 = vmatprep.subr.bf16.mxu0 0
    %904 = vmatpush1.bf16.msra.mxu0 0
    %905 = vmatprep.mubr.bf16.mxu0 0
    %906 = vmatmul.mubr.bf16.gmra.mrb[0].mxu0 %v871
    %v907 = vpop.f32.mrb[0].mxu0
    %v908 = vadd.f32 %v845, %v907
    %v909 = vpop.f32.mrb[0].mxu0
    %v910 = vpop.f32.mrb[0].mxu0
    %v911 = vpop.f32.mrb[0].mxu0
    %912 = vdwg.mxu0
    %914 = vrot.lane.b32.xlu0 %v553, 96
    %v915 = vpop.permute.xlu0 %914
    %v917 = vadd.f32 %v908, %v915
    %v918 = vxor.u32 %v917, 2147483648
    %v919 = vmul.f32 %v918, 1.442695
    %v920 = vpow.pop %v919
    %v921 = vadd.f32 %v920, 1.0
    %v922 = vrcp.pop %v921
    %v923 = vmul.f32 1.0, %v922
    %924 = vrot.lane.b32.xlu0 %v553, 32
    %v925 = vpop.permute.xlu0 %924
    %v927 = vmul.f32 %v923, %v925
    %929 = vrot.lane.b32.xlu0 %v927, 64
    %v930 = vpop.permute.xlu0 %929
    %v932 = vadd.f32 %v908, %v930
    %v933 = vtanh.pop %v932
    %v934 = vsub.f32 1.0, %v923
    %936 = vrot.lane.b32.xlu0 %v933, 96
    %v937 = vpop.permute.xlu0 %936
    %v939 = vmul.f32 %v934, %v937
    %v940 = vcombine.low %v41, %v42
    %v941 = vcombine.low %v43, %v44
    %v943 = vunpack.c.l.s4 1966171168
    %v944 = vunpack.c.0.s8 %v943
    %v945 = vlaneseq
    %v946 = vshrl.u32 %v945, 7
    %v947 = vsub.s32 %v944, %v946
    %v948 = vrot.slane %v940, %v947
    %v950 = vunpack.c.l.s4 1966171168
    %v951 = vunpack.c.0.s8 %v950
    %v952 = vlaneseq
    %v953 = vshrl.u32 %v952, 7
    %v954 = vsub.s32 %v951, %v953
    %v955 = vrot.slane %v941, %v954
    %v956 = vcombine.low %v948, %v955
    %v958 = vunpack.c.l.s4 1966171168
    %v959 = vunpack.c.0.s8 %v958
    %v960 = vlaneseq
    %v961 = vshrl.u32 %v960, 7
    %v962 = vsub.s32 %v959, %v961
    %v963 = vrot.slane %v956, %v962
    %964 = vrot.lane.b32.xlu0 %v963, 32
    %v965 = vpop.permute.xlu0 %964
    %v967 = vmul.f32 %v923, %v965
    %v968 = vadd.f32 %v939, %v967
    %v971 = vunpack.c.l.s4 1966171168
    %v972 = vunpack.c.0.s8 %v971
    %v973 = vlaneseq
    %v974 = vshrl.u32 %v973, 7
    %v975 = vsub.s32 %v972, %v974
    %v976 = vrot.slane %v968, %v975
    %v977 = vcombine.high %v976, %v976
    %v979 = vunpack.c.l.s4 1966171168
    %v980 = vunpack.c.0.s8 %v979
    %v981 = vlaneseq
    %v982 = vshrl.u32 %v981, 7
    %v983 = vsub.s32 %v980, %v982
    %v984 = vrot.slane %v976, %v983
    %v986 = vunpack.c.l.s4 1966171168
    %v987 = vunpack.c.0.s8 %v986
    %v988 = vlaneseq
    %v989 = vshrl.u32 %v988, 7
    %v990 = vsub.s32 %v987, %v989
    %v991 = vrot.slane %v977, %v990
    %v992 = vcombine.high %v984, %v984
    %v993 = vcombine.high %v991, %v991
    %v994 = vpack.c.bf16 %v968, %v968
    %996 = vrot.lane.b32.xlu0 %v994, 96
    %v997 = vpop.permute.xlu0 %996
    %v999 = vsel %vm98, %v997, 0
    %1001 = vmatprep.subr.bf16.mxu0 0
    %1002 = vmatpush1.bf16.msra.mxu0 %v501
    %1003 = vmatprep.subr.bf16.mxu0 0
    %1004 = vmatpush1.bf16.msra.mxu0 %v502
    %1005 = vmatprep.subr.bf16.mxu0 0
    %1006 = vmatpush1.bf16.msra.mxu0 0
    %1007 = vmatprep.subr.bf16.mxu0 0
    %1008 = vmatpush1.bf16.msra.mxu0 0
    %1009 = vmatprep.subr.bf16.mxu0 0
    %1010 = vmatpush1.bf16.msra.mxu0 0
    %1011 = vmatprep.subr.bf16.mxu0 0
    %1012 = vmatpush1.bf16.msra.mxu0 0
    %1013 = vmatprep.subr.bf16.mxu0 0
    %1014 = vmatpush1.bf16.msra.mxu0 0
    %1015 = vmatprep.subr.bf16.mxu0 0
    %1016 = vmatpush1.bf16.msra.mxu0 0
    %1017 = vmatprep.subr.bf16.mxu0 0
    %1018 = vmatpush1.bf16.msra.mxu0 0
    %1019 = vmatprep.subr.bf16.mxu0 0
    %1020 = vmatpush1.bf16.msra.mxu0 0
    %1021 = vmatprep.subr.bf16.mxu0 0
    %1022 = vmatpush1.bf16.msra.mxu0 0
    %1023 = vmatprep.subr.bf16.mxu0 0
    %1024 = vmatpush1.bf16.msra.mxu0 0
    %1025 = vmatprep.subr.bf16.mxu0 0
    %1026 = vmatpush1.bf16.msra.mxu0 0
    %1027 = vmatprep.subr.bf16.mxu0 0
    %1028 = vmatpush1.bf16.msra.mxu0 0
    %1029 = vmatprep.subr.bf16.mxu0 0
    %1030 = vmatpush1.bf16.msra.mxu0 0
    %1031 = vmatprep.subr.bf16.mxu0 0
    %1032 = vmatpush1.bf16.msra.mxu0 0
    %1033 = vmatprep.mubr.bf16.mxu0 0
    %1034 = vmatmul.mubr.bf16.gmra.mrb[0].mxu0 %v999
    %v1035 = vpop.f32.mrb[0].mxu0
    %v1036 = vadd.f32 0.0, %v1035
    %v1037 = vpop.f32.mrb[0].mxu0
    %v1038 = vpop.f32.mrb[0].mxu0
    %v1039 = vpop.f32.mrb[0].mxu0
    %1040 = vdwg.mxu0
    %v1041 = vadd.f32 %v1036, %v551
    %v1042 = vlaneseq
    %v1043 = vshrl.u32 %v1042, 7
    %v1044 = vsub.s32 0, %v1043
    %v1045 = vrot.slane %v984, %v1044
    %v1046 = vlaneseq
    %v1047 = vshrl.u32 %v1046, 7
    %v1048 = vsub.s32 0, %v1047
    %v1049 = vrot.slane %v991, %v1048
    %v1050 = vlaneseq
    %v1051 = vshrl.u32 %v1050, 7
    %v1052 = vsub.s32 0, %v1051
    %v1053 = vrot.slane %v992, %v1052
    %v1054 = vlaneseq
    %v1055 = vshrl.u32 %v1054, 7
    %v1056 = vsub.s32 0, %v1055
    %v1057 = vrot.slane %v993, %v1056
    %1058 = vrot.lane.b32.xlu0 %v1045, 96
    %v1059 = vpop.permute.xlu0 %1058
    %1060 = vrot.lane.b32.xlu0 %v1049, 96
    %v1061 = vpop.permute.xlu0 %1060
    %1062 = vrot.lane.b32.xlu0 %v1053, 96
    %v1063 = vpop.permute.xlu0 %1062
    %1064 = vrot.lane.b32.xlu0 %v1057, 96
    %v1065 = vpop.permute.xlu0 %1064
    %v1070 = vmul.f32 %v140, %v1059
    %v1071 = vmul.f32 %v143, %v1061
    %v1072 = vmul.f32 %v148, %v1063
    %v1073 = vmul.f32 %v151, %v1065
    %v1074 = vsel %vm98, %v1070, 0.0
    %1075 = vadd.xlane.f32.xlu0 %v1074
    %v1076 = vpop.xlane.xlu0 %1075
    %v1077 = vsel %vm98, %v1071, 0.0
    %1078 = vadd.xlane.f32.xlu0 %v1077
    %v1079 = vpop.xlane.xlu0 %1078
    %v1080 = vsel %vm98, %v1072, 0.0
    %1081 = vadd.xlane.f32.xlu0 %v1080
    %v1082 = vpop.xlane.xlu0 %1081
    %v1083 = vsel %vm98, %v1073, 0.0
    %1084 = vadd.xlane.f32.xlu0 %v1083
    %v1085 = vpop.xlane.xlu0 %1084
    %v1086 = vmul.f32 %v37, %v1059
    %v1087 = vmul.f32 %v38, %v1061
    %v1088 = vmul.f32 %v39, %v1063
    %v1089 = vmul.f32 %v40, %v1065
    %v1090 = vsub.f32 %v37, %v1059
    %v1091 = vsub.f32 %v38, %v1061
    %v1092 = vsub.f32 %v39, %v1063
    %v1093 = vsub.f32 %v40, %v1065
    %v1094 = vand.u32 2147483647, %v1090
    %v1095 = vand.u32 2147483647, %v1091
    %v1096 = vand.u32 2147483647, %v1092
    %v1097 = vand.u32 2147483647, %v1093
    %1102 = vrot.lane.b32.xlu0 %v1094, 32
    %v1103 = vpop.permute.xlu0 %1102
    %1104 = vrot.lane.b32.xlu0 %v1095, 32
    %v1105 = vpop.permute.xlu0 %1104
    %1106 = vrot.lane.b32.xlu0 %v1096, 32
    %v1107 = vpop.permute.xlu0 %1106
    %1108 = vrot.lane.b32.xlu0 %v1097, 32
    %v1109 = vpop.permute.xlu0 %1108
    %v1114 = vsel %vm98, %v1086, %v1103
    %v1115 = vsel %vm98, %v1087, %v1105
    %v1116 = vsel %vm98, %v1088, %v1107
    %v1117 = vsel %vm98, %v1089, %v1109
    %v1120 = vunpack.c.l.s4 1966171168
    %v1121 = vunpack.c.0.s8 %v1120
    %v1122 = vlaneseq
    %v1123 = vshrl.u32 %v1122, 7
    %v1124 = vsub.s32 %v1121, %v1123
    %v1125 = vrot.slane %v1036, %v1124
    %v1126 = vcombine.high %v1125, %v1125
    %v1128 = vunpack.c.l.s4 1966171168
    %v1129 = vunpack.c.0.s8 %v1128
    %v1130 = vlaneseq
    %v1131 = vshrl.u32 %v1130, 7
    %v1132 = vsub.s32 %v1129, %v1131
    %v1133 = vrot.slane %v1125, %v1132
    %v1135 = vunpack.c.l.s4 1966171168
    %v1136 = vunpack.c.0.s8 %v1135
    %v1137 = vlaneseq
    %v1138 = vshrl.u32 %v1137, 7
    %v1139 = vsub.s32 %v1136, %v1138
    %v1140 = vrot.slane %v1126, %v1139
    %v1141 = vcombine.high %v1133, %v1133
    %v1142 = vcombine.high %v1140, %v1140
    %v1143 = vlaneseq
    %v1144 = vshrl.u32 %v1143, 7
    %v1145 = vsub.s32 0, %v1144
    %v1146 = vrot.slane %v1133, %v1145
    %v1147 = vlaneseq
    %v1148 = vshrl.u32 %v1147, 7
    %v1149 = vsub.s32 0, %v1148
    %v1150 = vrot.slane %v1140, %v1149
    %v1151 = vlaneseq
    %v1152 = vshrl.u32 %v1151, 7
    %v1153 = vsub.s32 0, %v1152
    %v1154 = vrot.slane %v1141, %v1153
    %v1155 = vlaneseq
    %v1156 = vshrl.u32 %v1155, 7
    %v1157 = vsub.s32 0, %v1156
    %v1158 = vrot.slane %v1142, %v1157
    %v1163 = vadd.f32 %v483, %v1146
    %v1164 = vadd.f32 %v484, %v1150
    %v1165 = vadd.f32 %v485, %v1154
    %v1166 = vadd.f32 %v486, %v1158
    %v1167 = vmul.f32 %v1076, %v622
    %v1168 = vmul.f32 %v1079, %v622
    %v1169 = vmul.f32 %v1082, %v622
    %v1170 = vmul.f32 %v1085, %v622
    %v1171 = vadd.f32 %v1163, %v1167
    %v1172 = vadd.f32 %v1164, %v1168
    %v1173 = vadd.f32 %v1165, %v1169
    %v1174 = vadd.f32 %v1166, %v1170
    %v1175 = vpack.c.bf16 %v1115, %v1114
    %v1176 = vpack.c.bf16 %v1117, %v1116
    %v1178 = vsel %vm242, %v1175, 0
    %v1181 = vsel %vm242, %v1176, 0
    %1183 = vmatprep.subr.bf16.mxu0 0
    %1184 = vmatpush1.bf16.msra.mxu0 %v649
    %1185 = vmatprep.subr.bf16.mxu0 0
    %1186 = vmatpush1.bf16.msra.mxu0 %v650
    %1187 = vmatprep.subr.bf16.mxu0 0
    %1188 = vmatpush1.bf16.msra.mxu0 %v651
    %1189 = vmatprep.subr.bf16.mxu0 0
    %1190 = vmatpush1.bf16.msra.mxu0 %v652
    %1191 = vmatprep.subr.bf16.mxu0 0
    %1192 = vmatpush1.bf16.msra.mxu0 0
    %1193 = vmatprep.subr.bf16.mxu0 0
    %1194 = vmatpush1.bf16.msra.mxu0 0
    %1195 = vmatprep.subr.bf16.mxu0 0
    %1196 = vmatpush1.bf16.msra.mxu0 0
    %1197 = vmatprep.subr.bf16.mxu0 0
    %1198 = vmatpush1.bf16.msra.mxu0 0
    %1199 = vmatprep.subr.bf16.mxu0 0
    %1200 = vmatpush1.bf16.msra.mxu0 0
    %1201 = vmatprep.subr.bf16.mxu0 0
    %1202 = vmatpush1.bf16.msra.mxu0 0
    %1203 = vmatprep.subr.bf16.mxu0 0
    %1204 = vmatpush1.bf16.msra.mxu0 0
    %1205 = vmatprep.subr.bf16.mxu0 0
    %1206 = vmatpush1.bf16.msra.mxu0 0
    %1207 = vmatprep.subr.bf16.mxu0 0
    %1208 = vmatpush1.bf16.msra.mxu0 0
    %1209 = vmatprep.subr.bf16.mxu0 0
    %1210 = vmatpush1.bf16.msra.mxu0 0
    %1211 = vmatprep.subr.bf16.mxu0 0
    %1212 = vmatpush1.bf16.msra.mxu0 0
    %1213 = vmatprep.subr.bf16.mxu0 0
    %1214 = vmatpush1.bf16.msra.mxu0 0
    %1215 = vmatprep.mubr.bf16.mxu0 0
    %1216 = vmatmul.mubr.bf16.gmra.mrb[0].mxu0 %v1178
    %v1217 = vpop.f32.mrb[0].mxu0
    %v1218 = vadd.f32 0.0, %v1217
    %v1219 = vpop.f32.mrb[0].mxu0
    %v1220 = vpop.f32.mrb[0].mxu0
    %v1221 = vadd.f32 0.0, %v1220
    %v1222 = vpop.f32.mrb[0].mxu0
    %1223 = vmatprep.mubr.bf16.mxu0 0
    %1224 = vmatmul.mubr.bf16.gmra.mrb[0].mxu0 %v1181
    %v1225 = vpop.f32.mrb[0].mxu0
    %v1226 = vadd.f32 0.0, %v1225
    %v1227 = vpop.f32.mrb[0].mxu0
    %v1228 = vpop.f32.mrb[0].mxu0
    %v1229 = vadd.f32 0.0, %v1228
    %v1230 = vpop.f32.mrb[0].mxu0
    %1231 = vdwg.mxu0
    %v1232 = vadd.f32 %v1171, %v1218
    %v1233 = vadd.f32 %v1172, %v1221
    %v1234 = vadd.f32 %v1173, %v1226
    %v1235 = vadd.f32 %v1174, %v1229
    %v1236 = vtanh.pop %v1232
    %v1237 = vtanh.pop %v1233
    %v1238 = vtanh.pop %v1234
    %v1239 = vtanh.pop %v1235
    %v1240 = vmul.f32 %v1236, %v723
    %v1241 = vmul.f32 %v1237, %v723
    %v1242 = vmul.f32 %v1238, %v723
    %v1243 = vmul.f32 %v1239, %v723
    %v1244 = vsel %vm98, %v1240, 0.0
    %1245 = vadd.xlane.f32.xlu0 %v1244
    %v1246 = vpop.xlane.xlu0 %1245
    %v1247 = vsel %vm98, %v1241, 0.0
    %1248 = vadd.xlane.f32.xlu0 %v1247
    %v1249 = vpop.xlane.xlu0 %1248
    %v1250 = vsel %vm98, %v1242, 0.0
    %1251 = vadd.xlane.f32.xlu0 %v1250
    %v1252 = vpop.xlane.xlu0 %1251
    %v1253 = vsel %vm98, %v1243, 0.0
    %1254 = vadd.xlane.f32.xlu0 %v1253
    %v1255 = vpop.xlane.xlu0 %1254
    %v1260 = vlaneseq
    %v1261 = vshrl.u32 %v1260, 7
    %v1262 = vsub.s32 %v488, %v1261
    %v1263 = vrot.slane %v1246, %v1262
    %v1264 = vlaneseq
    %v1265 = vshrl.u32 %v1264, 7
    %v1266 = vsub.s32 %v488, %v1265
    %v1267 = vrot.slane %v1249, %v1266
    %v1268 = vlaneseq
    %v1269 = vshrl.u32 %v1268, 7
    %v1270 = vsub.s32 %v488, %v1269
    %v1271 = vrot.slane %v1252, %v1270
    %v1272 = vlaneseq
    %v1273 = vshrl.u32 %v1272, 7
    %v1274 = vsub.s32 %v488, %v1273
    %v1275 = vrot.slane %v1255, %v1274
    %v1276 = vsel %vm354, %v1267, %v1263
    %v1277 = vsel %vm357, %v1271, %v1276
    %v1278 = vsel %vm360, %v1275, %v1277
    %v1280 = vsel %vm492, %v1278, -inf
    %v1281 = vsel %vm765, %v1280, -inf
    %1282 = vmax.xlane.f32.xlu0 %v1281
    %v1283 = vpop.xlane.xlu0 %1282
    %v1284 = vsub.f32 %v1280, %v1283
    %v1285 = vmul.f32 %v1284, 1.442695
    %v1286 = vpow.pop %v1285
    %v1287 = vsel %vm492, %v1286, 0.0
    %v1288 = vsel %vm765, %v1287, 0.0
    %1289 = vadd.xlane.f32.xlu0 %v1288
    %v1290 = vpop.xlane.xlu0 %1289
    %v1291 = vrcp.pop %v1290
    %v1292 = vmul.f32 %v1287, %v1291
    %v1293 = vlaneseq
    %v1294 = vshrl.u32 %v1293, 7
    %v1295 = vsub.s32 0, %v1294
    %v1296 = vrot.slane %v1292, %v1295
    %1298 = vbcast.lane.b32.xlu0 %v1296, 256
    %v1299 = vpop.permute.xlu0 %1298
    %v1300 = vlaneseq
    %v1301 = vshrl.u32 %v1300, 7
    %v1302 = vsub.s32 1, %v1301
    %v1303 = vrot.slane %v1292, %v1302
    %1305 = vbcast.lane.b32.xlu0 %v1303, 256
    %v1306 = vpop.permute.xlu0 %1305
    %v1307 = vlaneseq
    %v1308 = vshrl.u32 %v1307, 7
    %v1309 = vsub.s32 2, %v1308
    %v1310 = vrot.slane %v1292, %v1309
    %1312 = vbcast.lane.b32.xlu0 %v1310, 256
    %v1313 = vpop.permute.xlu0 %1312
    %v1314 = vlaneseq
    %v1315 = vshrl.u32 %v1314, 7
    %v1316 = vsub.s32 3, %v1315
    %v1317 = vrot.slane %v1292, %v1316
    %1319 = vbcast.lane.b32.xlu0 %v1317, 256
    %v1320 = vpop.permute.xlu0 %1319
    %v1321 = vmul.f32 %v37, %v1299
    %v1322 = vmul.f32 %v38, %v1306
    %v1323 = vmul.f32 %v39, %v1313
    %v1324 = vmul.f32 %v40, %v1320
    %v1325 = vsel %vm98, %v1321, 0.0
    %v1326 = vrot.slane %v1325, 4
    %v1327 = vadd.f32 %v1325, %v1326
    %v1328 = vrot.slane %v1327, 2
    %v1329 = vadd.f32 %v1327, %v1328
    %v1330 = vrot.slane %v1329, 1
    %v1331 = vadd.f32 %v1329, %v1330
    %v1332 = vsel %vm98, %v1322, 0.0
    %v1333 = vrot.slane %v1332, 4
    %v1334 = vadd.f32 %v1332, %v1333
    %v1335 = vrot.slane %v1334, 2
    %v1336 = vadd.f32 %v1334, %v1335
    %v1337 = vrot.slane %v1336, 1
    %v1338 = vadd.f32 %v1336, %v1337
    %v1339 = vsel %vm98, %v1323, 0.0
    %v1340 = vrot.slane %v1339, 4
    %v1341 = vadd.f32 %v1339, %v1340
    %v1342 = vrot.slane %v1341, 2
    %v1343 = vadd.f32 %v1341, %v1342
    %v1344 = vrot.slane %v1343, 1
    %v1345 = vadd.f32 %v1343, %v1344
    %v1346 = vsel %vm98, %v1324, 0.0
    %v1347 = vrot.slane %v1346, 4
    %v1348 = vadd.f32 %v1346, %v1347
    %v1349 = vrot.slane %v1348, 2
    %v1350 = vadd.f32 %v1348, %v1349
    %v1351 = vrot.slane %v1350, 1
    %v1352 = vadd.f32 %v1350, %v1351
    %v1353 = vpack.c.bf16 %v1331, %v1331
    %v1354 = vpack.c.bf16 %v1338, %v1338
    %v1355 = vpack.c.bf16 %v1345, %v1345
    %v1356 = vpack.c.bf16 %v1352, %v1352
    %v1361 = vunpack.c.l.b16 %v1353
    %v1362 = vunpack.c.l.b16 %v1354
    %v1363 = vunpack.c.l.b16 %v1355
    %v1364 = vunpack.c.l.b16 %v1356
    %v1365 = vsel %vm354, %v1362, %v1361
    %v1366 = vsel %vm357, %v1363, %v1365
    %v1367 = vsel %vm360, %v1364, %v1366
    %v1368 = vpack.c.b16 %v1367, %v1367
    %v1370 = vsel %vm98, %v1368, 0
    %1372 = vmatprep.subr.bf16.mxu0 0
    %1373 = vmatpush1.bf16.msra.mxu0 %v866
    %1374 = vmatprep.subr.bf16.mxu0 0
    %1375 = vmatpush1.bf16.msra.mxu0 %v867
    %1376 = vmatprep.subr.bf16.mxu0 0
    %1377 = vmatpush1.bf16.msra.mxu0 0
    %1378 = vmatprep.subr.bf16.mxu0 0
    %1379 = vmatpush1.bf16.msra.mxu0 0
    %1380 = vmatprep.subr.bf16.mxu0 0
    %1381 = vmatpush1.bf16.msra.mxu0 0
    %1382 = vmatprep.subr.bf16.mxu0 0
    %1383 = vmatpush1.bf16.msra.mxu0 0
    %1384 = vmatprep.subr.bf16.mxu0 0
    %1385 = vmatpush1.bf16.msra.mxu0 0
    %1386 = vmatprep.subr.bf16.mxu0 0
    %1387 = vmatpush1.bf16.msra.mxu0 0
    %1388 = vmatprep.subr.bf16.mxu0 0
    %1389 = vmatpush1.bf16.msra.mxu0 0
    %1390 = vmatprep.subr.bf16.mxu0 0
    %1391 = vmatpush1.bf16.msra.mxu0 0
    %1392 = vmatprep.subr.bf16.mxu0 0
    %1393 = vmatpush1.bf16.msra.mxu0 0
    %1394 = vmatprep.subr.bf16.mxu0 0
    %1395 = vmatpush1.bf16.msra.mxu0 0
    %1396 = vmatprep.subr.bf16.mxu0 0
    %1397 = vmatpush1.bf16.msra.mxu0 0
    %1398 = vmatprep.subr.bf16.mxu0 0
    %1399 = vmatpush1.bf16.msra.mxu0 0
    %1400 = vmatprep.subr.bf16.mxu0 0
    %1401 = vmatpush1.bf16.msra.mxu0 0
    %1402 = vmatprep.subr.bf16.mxu0 0
    %1403 = vmatpush1.bf16.msra.mxu0 0
    %1404 = vmatprep.mubr.bf16.mxu0 0
    %1405 = vmatmul.mubr.bf16.gmra.mrb[0].mxu0 %v1370
    %v1406 = vpop.f32.mrb[0].mxu0
    %v1407 = vadd.f32 %v845, %v1406
    %v1408 = vpop.f32.mrb[0].mxu0
    %v1409 = vpop.f32.mrb[0].mxu0
    %v1410 = vpop.f32.mrb[0].mxu0
    %1411 = vdwg.mxu0
    %1413 = vrot.lane.b32.xlu0 %v1041, 96
    %v1414 = vpop.permute.xlu0 %1413
    %v1416 = vadd.f32 %v1407, %v1414
    %v1417 = vxor.u32 %v1416, 2147483648
    %v1418 = vmul.f32 %v1417, 1.442695
    %v1419 = vpow.pop %v1418
    %v1420 = vadd.f32 %v1419, 1.0
    %v1421 = vrcp.pop %v1420
    %v1422 = vmul.f32 1.0, %v1421
    %1423 = vrot.lane.b32.xlu0 %v1041, 32
    %v1424 = vpop.permute.xlu0 %1423
    %v1426 = vmul.f32 %v1422, %v1424
    %1428 = vrot.lane.b32.xlu0 %v1426, 64
    %v1429 = vpop.permute.xlu0 %1428
    %v1431 = vadd.f32 %v1407, %v1429
    %v1432 = vtanh.pop %v1431
    %v1433 = vsub.f32 1.0, %v1422
    %1435 = vrot.lane.b32.xlu0 %v1432, 96
    %v1436 = vpop.permute.xlu0 %1435
    %v1438 = vmul.f32 %v1433, %v1436
    %v1439 = vmul.f32 %v1422, %v968
    %v1440 = vadd.f32 %v1438, %v1439
    %v1443 = vunpack.c.l.s4 1966171168
    %v1444 = vunpack.c.0.s8 %v1443
    %v1445 = vlaneseq
    %v1446 = vshrl.u32 %v1445, 7
    %v1447 = vsub.s32 %v1444, %v1446
    %v1448 = vrot.slane %v1440, %v1447
    %v1449 = vcombine.high %v1448, %v1448
    %v1451 = vunpack.c.l.s4 1966171168
    %v1452 = vunpack.c.0.s8 %v1451
    %v1453 = vlaneseq
    %v1454 = vshrl.u32 %v1453, 7
    %v1455 = vsub.s32 %v1452, %v1454
    %v1456 = vrot.slane %v1448, %v1455
    %v1458 = vunpack.c.l.s4 1966171168
    %v1459 = vunpack.c.0.s8 %v1458
    %v1460 = vlaneseq
    %v1461 = vshrl.u32 %v1460, 7
    %v1462 = vsub.s32 %v1459, %v1461
    %v1463 = vrot.slane %v1449, %v1462
    %v1464 = vcombine.high %v1456, %v1456
    %v1465 = vcombine.high %v1463, %v1463
    %v1466 = vpack.c.bf16 %v1440, %v1440
    %1468 = vrot.lane.b32.xlu0 %v1466, 96
    %v1469 = vpop.permute.xlu0 %1468
    %v1471 = vsel %vm98, %v1469, 0
    %1473 = vmatprep.subr.bf16.mxu0 0
    %1474 = vmatpush1.bf16.msra.mxu0 %v501
    %1475 = vmatprep.subr.bf16.mxu0 0
    %1476 = vmatpush1.bf16.msra.mxu0 %v502
    %1477 = vmatprep.subr.bf16.mxu0 0
    %1478 = vmatpush1.bf16.msra.mxu0 0
    %1479 = vmatprep.subr.bf16.mxu0 0
    %1480 = vmatpush1.bf16.msra.mxu0 0
    %1481 = vmatprep.subr.bf16.mxu0 0
    %1482 = vmatpush1.bf16.msra.mxu0 0
    %1483 = vmatprep.subr.bf16.mxu0 0
    %1484 = vmatpush1.bf16.msra.mxu0 0
    %1485 = vmatprep.subr.bf16.mxu0 0
    %1486 = vmatpush1.bf16.msra.mxu0 0
    %1487 = vmatprep.subr.bf16.mxu0 0
    %1488 = vmatpush1.bf16.msra.mxu0 0
    %1489 = vmatprep.subr.bf16.mxu0 0
    %1490 = vmatpush1.bf16.msra.mxu0 0
    %1491 = vmatprep.subr.bf16.mxu0 0
    %1492 = vmatpush1.bf16.msra.mxu0 0
    %1493 = vmatprep.subr.bf16.mxu0 0
    %1494 = vmatpush1.bf16.msra.mxu0 0
    %1495 = vmatprep.subr.bf16.mxu0 0
    %1496 = vmatpush1.bf16.msra.mxu0 0
    %1497 = vmatprep.subr.bf16.mxu0 0
    %1498 = vmatpush1.bf16.msra.mxu0 0
    %1499 = vmatprep.subr.bf16.mxu0 0
    %1500 = vmatpush1.bf16.msra.mxu0 0
    %1501 = vmatprep.subr.bf16.mxu0 0
    %1502 = vmatpush1.bf16.msra.mxu0 0
    %1503 = vmatprep.subr.bf16.mxu0 0
    %1504 = vmatpush1.bf16.msra.mxu0 0
    %1505 = vmatprep.mubr.bf16.mxu0 0
    %1506 = vmatmul.mubr.bf16.gmra.mrb[0].mxu0 %v1471
    %v1507 = vpop.f32.mrb[0].mxu0
    %v1508 = vadd.f32 0.0, %v1507
    %v1509 = vpop.f32.mrb[0].mxu0
    %v1510 = vpop.f32.mrb[0].mxu0
    %v1511 = vpop.f32.mrb[0].mxu0
    %1512 = vdwg.mxu0
    %v1513 = vadd.f32 %v1508, %v551
    %v1514 = vlaneseq
    %v1515 = vshrl.u32 %v1514, 7
    %v1516 = vsub.s32 0, %v1515
    %v1517 = vrot.slane %v1456, %v1516
    %v1518 = vlaneseq
    %v1519 = vshrl.u32 %v1518, 7
    %v1520 = vsub.s32 0, %v1519
    %v1521 = vrot.slane %v1463, %v1520
    %v1522 = vlaneseq
    %v1523 = vshrl.u32 %v1522, 7
    %v1524 = vsub.s32 0, %v1523
    %v1525 = vrot.slane %v1464, %v1524
    %v1526 = vlaneseq
    %v1527 = vshrl.u32 %v1526, 7
    %v1528 = vsub.s32 0, %v1527
    %v1529 = vrot.slane %v1465, %v1528
    %1530 = vrot.lane.b32.xlu0 %v1517, 96
    %v1531 = vpop.permute.xlu0 %1530
    %1532 = vrot.lane.b32.xlu0 %v1521, 96
    %v1533 = vpop.permute.xlu0 %1532
    %1534 = vrot.lane.b32.xlu0 %v1525, 96
    %v1535 = vpop.permute.xlu0 %1534
    %1536 = vrot.lane.b32.xlu0 %v1529, 96
    %v1537 = vpop.permute.xlu0 %1536
    %v1542 = vmul.f32 %v140, %v1531
    %v1543 = vmul.f32 %v143, %v1533
    %v1544 = vmul.f32 %v148, %v1535
    %v1545 = vmul.f32 %v151, %v1537
    %v1546 = vsel %vm98, %v1542, 0.0
    %1547 = vadd.xlane.f32.xlu0 %v1546
    %v1548 = vpop.xlane.xlu0 %1547
    %v1549 = vsel %vm98, %v1543, 0.0
    %1550 = vadd.xlane.f32.xlu0 %v1549
    %v1551 = vpop.xlane.xlu0 %1550
    %v1552 = vsel %vm98, %v1544, 0.0
    %1553 = vadd.xlane.f32.xlu0 %v1552
    %v1554 = vpop.xlane.xlu0 %1553
    %v1555 = vsel %vm98, %v1545, 0.0
    %1556 = vadd.xlane.f32.xlu0 %v1555
    %v1557 = vpop.xlane.xlu0 %1556
    %v1558 = vmul.f32 %v37, %v1531
    %v1559 = vmul.f32 %v38, %v1533
    %v1560 = vmul.f32 %v39, %v1535
    %v1561 = vmul.f32 %v40, %v1537
    %v1562 = vsub.f32 %v37, %v1531
    %v1563 = vsub.f32 %v38, %v1533
    %v1564 = vsub.f32 %v39, %v1535
    %v1565 = vsub.f32 %v40, %v1537
    %v1566 = vand.u32 2147483647, %v1562
    %v1567 = vand.u32 2147483647, %v1563
    %v1568 = vand.u32 2147483647, %v1564
    %v1569 = vand.u32 2147483647, %v1565
    %1574 = vrot.lane.b32.xlu0 %v1566, 32
    %v1575 = vpop.permute.xlu0 %1574
    %1576 = vrot.lane.b32.xlu0 %v1567, 32
    %v1577 = vpop.permute.xlu0 %1576
    %1578 = vrot.lane.b32.xlu0 %v1568, 32
    %v1579 = vpop.permute.xlu0 %1578
    %1580 = vrot.lane.b32.xlu0 %v1569, 32
    %v1581 = vpop.permute.xlu0 %1580
    %v1586 = vsel %vm98, %v1558, %v1575
    %v1587 = vsel %vm98, %v1559, %v1577
    %v1588 = vsel %vm98, %v1560, %v1579
    %v1589 = vsel %vm98, %v1561, %v1581
    %v1592 = vunpack.c.l.s4 1966171168
    %v1593 = vunpack.c.0.s8 %v1592
    %v1594 = vlaneseq
    %v1595 = vshrl.u32 %v1594, 7
    %v1596 = vsub.s32 %v1593, %v1595
    %v1597 = vrot.slane %v1508, %v1596
    %v1598 = vcombine.high %v1597, %v1597
    %v1600 = vunpack.c.l.s4 1966171168
    %v1601 = vunpack.c.0.s8 %v1600
    %v1602 = vlaneseq
    %v1603 = vshrl.u32 %v1602, 7
    %v1604 = vsub.s32 %v1601, %v1603
    %v1605 = vrot.slane %v1597, %v1604
    %v1607 = vunpack.c.l.s4 1966171168
    %v1608 = vunpack.c.0.s8 %v1607
    %v1609 = vlaneseq
    %v1610 = vshrl.u32 %v1609, 7
    %v1611 = vsub.s32 %v1608, %v1610
    %v1612 = vrot.slane %v1598, %v1611
    %v1613 = vcombine.high %v1605, %v1605
    %v1614 = vcombine.high %v1612, %v1612
    %v1615 = vlaneseq
    %v1616 = vshrl.u32 %v1615, 7
    %v1617 = vsub.s32 0, %v1616
    %v1618 = vrot.slane %v1605, %v1617
    %v1619 = vlaneseq
    %v1620 = vshrl.u32 %v1619, 7
    %v1621 = vsub.s32 0, %v1620
    %v1622 = vrot.slane %v1612, %v1621
    %v1623 = vlaneseq
    %v1624 = vshrl.u32 %v1623, 7
    %v1625 = vsub.s32 0, %v1624
    %v1626 = vrot.slane %v1613, %v1625
    %v1627 = vlaneseq
    %v1628 = vshrl.u32 %v1627, 7
    %v1629 = vsub.s32 0, %v1628
    %v1630 = vrot.slane %v1614, %v1629
    %v1635 = vadd.f32 %v483, %v1618
    %v1636 = vadd.f32 %v484, %v1622
    %v1637 = vadd.f32 %v485, %v1626
    %v1638 = vadd.f32 %v486, %v1630
    %v1639 = vmul.f32 %v1548, %v622
    %v1640 = vmul.f32 %v1551, %v622
    %v1641 = vmul.f32 %v1554, %v622
    %v1642 = vmul.f32 %v1557, %v622
    %v1643 = vadd.f32 %v1635, %v1639
    %v1644 = vadd.f32 %v1636, %v1640
    %v1645 = vadd.f32 %v1637, %v1641
    %v1646 = vadd.f32 %v1638, %v1642
    %v1647 = vpack.c.bf16 %v1587, %v1586
    %v1648 = vpack.c.bf16 %v1589, %v1588
    %v1650 = vsel %vm242, %v1647, 0
    %v1653 = vsel %vm242, %v1648, 0
    %1655 = vmatprep.subr.bf16.mxu0 0
    %1656 = vmatpush1.bf16.msra.mxu0 %v649
    %1657 = vmatprep.subr.bf16.mxu0 0
    %1658 = vmatpush1.bf16.msra.mxu0 %v650
    %1659 = vmatprep.subr.bf16.mxu0 0
    %1660 = vmatpush1.bf16.msra.mxu0 %v651
    %1661 = vmatprep.subr.bf16.mxu0 0
    %1662 = vmatpush1.bf16.msra.mxu0 %v652
    %1663 = vmatprep.subr.bf16.mxu0 0
    %1664 = vmatpush1.bf16.msra.mxu0 0
    %1665 = vmatprep.subr.bf16.mxu0 0
    %1666 = vmatpush1.bf16.msra.mxu0 0
    %1667 = vmatprep.subr.bf16.mxu0 0
    %1668 = vmatpush1.bf16.msra.mxu0 0
    %1669 = vmatprep.subr.bf16.mxu0 0
    %1670 = vmatpush1.bf16.msra.mxu0 0
    %1671 = vmatprep.subr.bf16.mxu0 0
    %1672 = vmatpush1.bf16.msra.mxu0 0
    %1673 = vmatprep.subr.bf16.mxu0 0
    %1674 = vmatpush1.bf16.msra.mxu0 0
    %1675 = vmatprep.subr.bf16.mxu0 0
    %1676 = vmatpush1.bf16.msra.mxu0 0
    %1677 = vmatprep.subr.bf16.mxu0 0
    %1678 = vmatpush1.bf16.msra.mxu0 0
    %1679 = vmatprep.subr.bf16.mxu0 0
    %1680 = vmatpush1.bf16.msra.mxu0 0
    %1681 = vmatprep.subr.bf16.mxu0 0
    %1682 = vmatpush1.bf16.msra.mxu0 0
    %1683 = vmatprep.subr.bf16.mxu0 0
    %1684 = vmatpush1.bf16.msra.mxu0 0
    %1685 = vmatprep.subr.bf16.mxu0 0
    %1686 = vmatpush1.bf16.msra.mxu0 0
    %1687 = vmatprep.mubr.bf16.mxu0 0
    %1688 = vmatmul.mubr.bf16.gmra.mrb[0].mxu0 %v1650
    %v1689 = vpop.f32.mrb[0].mxu0
    %v1690 = vadd.f32 0.0, %v1689
    %v1691 = vpop.f32.mrb[0].mxu0
    %v1692 = vpop.f32.mrb[0].mxu0
    %v1693 = vadd.f32 0.0, %v1692
    %v1694 = vpop.f32.mrb[0].mxu0
    %1695 = vmatprep.mubr.bf16.mxu0 0
    %1696 = vmatmul.mubr.bf16.gmra.mrb[0].mxu0 %v1653
    %v1697 = vpop.f32.mrb[0].mxu0
    %v1698 = vadd.f32 0.0, %v1697
    %v1699 = vpop.f32.mrb[0].mxu0
    %v1700 = vpop.f32.mrb[0].mxu0
    %v1701 = vadd.f32 0.0, %v1700
    %v1702 = vpop.f32.mrb[0].mxu0
    %1703 = vdwg.mxu0
    %v1704 = vadd.f32 %v1643, %v1690
    %v1705 = vadd.f32 %v1644, %v1693
    %v1706 = vadd.f32 %v1645, %v1698
    %v1707 = vadd.f32 %v1646, %v1701
    %v1708 = vtanh.pop %v1704
    %v1709 = vtanh.pop %v1705
    %v1710 = vtanh.pop %v1706
    %v1711 = vtanh.pop %v1707
    %v1712 = vmul.f32 %v1708, %v723
    %v1713 = vmul.f32 %v1709, %v723
    %v1714 = vmul.f32 %v1710, %v723
    %v1715 = vmul.f32 %v1711, %v723
    %v1716 = vsel %vm98, %v1712, 0.0
    %1717 = vadd.xlane.f32.xlu0 %v1716
    %v1718 = vpop.xlane.xlu0 %1717
    %v1719 = vsel %vm98, %v1713, 0.0
    %1720 = vadd.xlane.f32.xlu0 %v1719
    %v1721 = vpop.xlane.xlu0 %1720
    %v1722 = vsel %vm98, %v1714, 0.0
    %1723 = vadd.xlane.f32.xlu0 %v1722
    %v1724 = vpop.xlane.xlu0 %1723
    %v1725 = vsel %vm98, %v1715, 0.0
    %1726 = vadd.xlane.f32.xlu0 %v1725
    %v1727 = vpop.xlane.xlu0 %1726
    %v1732 = vlaneseq
    %v1733 = vshrl.u32 %v1732, 7
    %v1734 = vsub.s32 %v488, %v1733
    %v1735 = vrot.slane %v1718, %v1734
    %v1736 = vlaneseq
    %v1737 = vshrl.u32 %v1736, 7
    %v1738 = vsub.s32 %v488, %v1737
    %v1739 = vrot.slane %v1721, %v1738
    %v1740 = vlaneseq
    %v1741 = vshrl.u32 %v1740, 7
    %v1742 = vsub.s32 %v488, %v1741
    %v1743 = vrot.slane %v1724, %v1742
    %v1744 = vlaneseq
    %v1745 = vshrl.u32 %v1744, 7
    %v1746 = vsub.s32 %v488, %v1745
    %v1747 = vrot.slane %v1727, %v1746
    %v1748 = vsel %vm354, %v1739, %v1735
    %v1749 = vsel %vm357, %v1743, %v1748
    %v1750 = vsel %vm360, %v1747, %v1749
    %v1752 = vsel %vm492, %v1750, -inf
    %v1753 = vsel %vm765, %v1752, -inf
    %1754 = vmax.xlane.f32.xlu0 %v1753
    %v1755 = vpop.xlane.xlu0 %1754
    %v1756 = vsub.f32 %v1752, %v1755
    %v1757 = vmul.f32 %v1756, 1.442695
    %v1758 = vpow.pop %v1757
    %v1759 = vsel %vm492, %v1758, 0.0
    %v1760 = vsel %vm765, %v1759, 0.0
    %1761 = vadd.xlane.f32.xlu0 %v1760
    %v1762 = vpop.xlane.xlu0 %1761
    %v1763 = vrcp.pop %v1762
    %v1764 = vmul.f32 %v1759, %v1763
    %v1765 = vlaneseq
    %v1766 = vshrl.u32 %v1765, 7
    %v1767 = vsub.s32 0, %v1766
    %v1768 = vrot.slane %v1764, %v1767
    %1770 = vbcast.lane.b32.xlu0 %v1768, 256
    %v1771 = vpop.permute.xlu0 %1770
    %v1772 = vlaneseq
    %v1773 = vshrl.u32 %v1772, 7
    %v1774 = vsub.s32 1, %v1773
    %v1775 = vrot.slane %v1764, %v1774
    %1777 = vbcast.lane.b32.xlu0 %v1775, 256
    %v1778 = vpop.permute.xlu0 %1777
    %v1779 = vlaneseq
    %v1780 = vshrl.u32 %v1779, 7
    %v1781 = vsub.s32 2, %v1780
    %v1782 = vrot.slane %v1764, %v1781
    %1784 = vbcast.lane.b32.xlu0 %v1782, 256
    %v1785 = vpop.permute.xlu0 %1784
    %v1786 = vlaneseq
    %v1787 = vshrl.u32 %v1786, 7
    %v1788 = vsub.s32 3, %v1787
    %v1789 = vrot.slane %v1764, %v1788
    %1791 = vbcast.lane.b32.xlu0 %v1789, 256
    %v1792 = vpop.permute.xlu0 %1791
    %v1793 = vmul.f32 %v37, %v1771
    %v1794 = vmul.f32 %v38, %v1778
    %v1795 = vmul.f32 %v39, %v1785
    %v1796 = vmul.f32 %v40, %v1792
    %v1797 = vsel %vm98, %v1793, 0.0
    %v1798 = vrot.slane %v1797, 4
    %v1799 = vadd.f32 %v1797, %v1798
    %v1800 = vrot.slane %v1799, 2
    %v1801 = vadd.f32 %v1799, %v1800
    %v1802 = vrot.slane %v1801, 1
    %v1803 = vadd.f32 %v1801, %v1802
    %v1804 = vsel %vm98, %v1794, 0.0
    %v1805 = vrot.slane %v1804, 4
    %v1806 = vadd.f32 %v1804, %v1805
    %v1807 = vrot.slane %v1806, 2
    %v1808 = vadd.f32 %v1806, %v1807
    %v1809 = vrot.slane %v1808, 1
    %v1810 = vadd.f32 %v1808, %v1809
    %v1811 = vsel %vm98, %v1795, 0.0
    %v1812 = vrot.slane %v1811, 4
    %v1813 = vadd.f32 %v1811, %v1812
    %v1814 = vrot.slane %v1813, 2
    %v1815 = vadd.f32 %v1813, %v1814
    %v1816 = vrot.slane %v1815, 1
    %v1817 = vadd.f32 %v1815, %v1816
    %v1818 = vsel %vm98, %v1796, 0.0
    %v1819 = vrot.slane %v1818, 4
    %v1820 = vadd.f32 %v1818, %v1819
    %v1821 = vrot.slane %v1820, 2
    %v1822 = vadd.f32 %v1820, %v1821
    %v1823 = vrot.slane %v1822, 1
    %v1824 = vadd.f32 %v1822, %v1823
    %v1825 = vpack.c.bf16 %v1803, %v1803
    %v1826 = vpack.c.bf16 %v1810, %v1810
    %v1827 = vpack.c.bf16 %v1817, %v1817
    %v1828 = vpack.c.bf16 %v1824, %v1824
    %v1833 = vunpack.c.l.b16 %v1825
    %v1834 = vunpack.c.l.b16 %v1826
    %v1835 = vunpack.c.l.b16 %v1827
    %v1836 = vunpack.c.l.b16 %v1828
    %v1837 = vsel %vm354, %v1834, %v1833
    %v1838 = vsel %vm357, %v1835, %v1837
    %v1839 = vsel %vm360, %v1836, %v1838
    %v1840 = vpack.c.b16 %v1839, %v1839
    %v1842 = vsel %vm98, %v1840, 0
    %1844 = vmatprep.subr.bf16.mxu0 0
    %1845 = vmatpush1.bf16.msra.mxu0 %v866
    %1846 = vmatprep.subr.bf16.mxu0 0
    %1847 = vmatpush1.bf16.msra.mxu0 %v867
    %1848 = vmatprep.subr.bf16.mxu0 0
    %1849 = vmatpush1.bf16.msra.mxu0 0
    %1850 = vmatprep.subr.bf16.mxu0 0
    %1851 = vmatpush1.bf16.msra.mxu0 0
    %1852 = vmatprep.subr.bf16.mxu0 0
    %1853 = vmatpush1.bf16.msra.mxu0 0
    %1854 = vmatprep.subr.bf16.mxu0 0
    %1855 = vmatpush1.bf16.msra.mxu0 0
    %1856 = vmatprep.subr.bf16.mxu0 0
    %1857 = vmatpush1.bf16.msra.mxu0 0
    %1858 = vmatprep.subr.bf16.mxu0 0
    %1859 = vmatpush1.bf16.msra.mxu0 0
    %1860 = vmatprep.subr.bf16.mxu0 0
    %1861 = vmatpush1.bf16.msra.mxu0 0
    %1862 = vmatprep.subr.bf16.mxu0 0
    %1863 = vmatpush1.bf16.msra.mxu0 0
    %1864 = vmatprep.subr.bf16.mxu0 0
    %1865 = vmatpush1.bf16.msra.mxu0 0
    %1866 = vmatprep.subr.bf16.mxu0 0
    %1867 = vmatpush1.bf16.msra.mxu0 0
    %1868 = vmatprep.subr.bf16.mxu0 0
    %1869 = vmatpush1.bf16.msra.mxu0 0
    %1870 = vmatprep.subr.bf16.mxu0 0
    %1871 = vmatpush1.bf16.msra.mxu0 0
    %1872 = vmatprep.subr.bf16.mxu0 0
    %1873 = vmatpush1.bf16.msra.mxu0 0
    %1874 = vmatprep.subr.bf16.mxu0 0
    %1875 = vmatpush1.bf16.msra.mxu0 0
    %1876 = vmatprep.mubr.bf16.mxu0 0
    %1877 = vmatmul.mubr.bf16.gmra.mrb[0].mxu0 %v1842
    %v1878 = vpop.f32.mrb[0].mxu0
    %v1879 = vadd.f32 %v845, %v1878
    %v1880 = vpop.f32.mrb[0].mxu0
    %v1881 = vpop.f32.mrb[0].mxu0
    %v1882 = vpop.f32.mrb[0].mxu0
    %1883 = vdwg.mxu0
    %1885 = vrot.lane.b32.xlu0 %v1513, 96
    %v1886 = vpop.permute.xlu0 %1885
    %v1888 = vadd.f32 %v1879, %v1886
    %v1889 = vxor.u32 %v1888, 2147483648
    %v1890 = vmul.f32 %v1889, 1.442695
    %v1891 = vpow.pop %v1890
    %v1892 = vadd.f32 %v1891, 1.0
    %v1893 = vrcp.pop %v1892
    %v1894 = vmul.f32 1.0, %v1893
    %1895 = vrot.lane.b32.xlu0 %v1513, 32
    %v1896 = vpop.permute.xlu0 %1895
    %v1898 = vmul.f32 %v1894, %v1896
    %1900 = vrot.lane.b32.xlu0 %v1898, 64
    %v1901 = vpop.permute.xlu0 %1900
    %v1903 = vadd.f32 %v1879, %v1901
    %v1904 = vtanh.pop %v1903
    %v1905 = vsub.f32 1.0, %v1894
    %1907 = vrot.lane.b32.xlu0 %v1904, 96
    %v1908 = vpop.permute.xlu0 %1907
    %v1910 = vmul.f32 %v1905, %v1908
    %v1911 = vmul.f32 %v1894, %v1440
    %v1912 = vadd.f32 %v1910, %v1911
    %1914 = vrot.lane.b32.xlu0 %v1912, 96
    %v1915 = vpop.permute.xlu0 %1914
    %vm1917 = vcmask 257024
    %1918 = vst.msk [vmem:[#allocation2] sm:$0xf] %vm1917, %v1915
    %1919 = vst.msk [vmem:[#allocation4] sm:$0xf] %vm765, %v777
    %1920 = vst.msk [vmem:[#allocation4 + $0x4] sm:$0xf] %vm765, %v1292
    %1921 = vst.msk [vmem:[#allocation4 + $0x8] sm:$0xf] %vm765, %v1764
    // Predicated region
    $region38: #{tpu_custom_call.1} parent=1 // pred_check
      _
    $region39: #{tpu_custom_call.1} parent=1 // pred_check_branch
      %1923 = sbr.rel (0) target = $region41
    $region40: #{tpu_custom_call.1} parent=1 // pred_region
      %s1925 = ssub.s32 64, 64
      %1926 = vsyncadd [#allocation3], %s1925
      %s1928 = sshll.u32 [#allocation2], 4
      %s1929 = int_to_ptr.vmem [resolvable:$true] %s1928
      %1931 = dma.vmem_to_hbm [thread:$0]  %s1929, 64, %s9, [#allocation3]
    $region41: #{tpu_custom_call.1} parent=1 // pred_fallthru
      _
    // Predicated region
    $region42: #{tpu_custom_call.1} parent=1 // pred_check
      _
    $region43: #{tpu_custom_call.1} parent=1 // pred_check_branch
      %1933 = sbr.rel (0) target = $region45
    $region44: #{tpu_custom_call.1} parent=1 // pred_region
      %s1935 = ssub.s32 192, 192
      %1936 = vsyncadd [#allocation5], %s1935
      %s1937 = sshll.u32 [#allocation4], 4
      %s1938 = int_to_ptr.vmem [resolvable:$true] %s1937
      %1943 = dma.vmem_to_hbm [thread:$0]  %s1938, 192, %s10, [#allocation5], 64, 64, 4
    $region45: #{tpu_custom_call.1} parent=1 // pred_fallthru
      _
    // Predicated region
    $region46: #{tpu_custom_call.1} parent=1 // pred_check
      _
    $region47: #{tpu_custom_call.1} parent=1 // pred_check_branch
      %1945 = sbr.rel (0) target = $region49
    $region48: #{tpu_custom_call.1} parent=1 // pred_region
      %1946 = dma.done [#allocation3], 64
    $region49: #{tpu_custom_call.1} parent=1 // pred_fallthru
      _
    // Predicated region
    $region50: #{tpu_custom_call.1} parent=1 // pred_check
      _
    $region51: #{tpu_custom_call.1} parent=1 // pred_check_branch
      %1948 = sbr.rel (0) target = $region53
    $region52: #{tpu_custom_call.1} parent=1 // pred_region
      %1949 = dma.done [#allocation5], 192
    $region53: #{tpu_custom_call.1} parent=1 // pred_fallthru
      _
    %1950 = vsyncpa [#allocation3], 1
    %1951 = vsyncpa [#allocation5], 1

</llo_original>
